<compile_context>
chip_gen: v6e
topology: v6e:2x2x1
jax: 0.10.0
libtpu: 0.0.40
codegen_flags: <defaults>
</compile_context>

<pallas_src>
import numpy as np
import jax
import jax.numpy as jnp
from jax import lax
from jax.experimental import pallas as pl
from jax.experimental.pallas import tpu as pltpu

# ---------------- small synthetic configuration ----------------
B = 2            # batch size (input_num)
S = 8            # args.max_seq_length      (Conv1d channels)
D = 32           # BERT hidden size         (Conv1d length)
H1 = 16          # args.hiddne_size1
SYM = 3          # number of symptoms (len(questions))
Q = 4            # questions per symptom
NUM_LABELS = 4   # args.num_labels
EPS = 1e-8       # args.eps

K1, K2, K22 = 5, 5, 2
NT = B + SYM * Q           # all sequences encoded together      = 14
L1 = D - K1 + 1            # conv1 output length                 = 28
L1P = L1 // 2              # after mp1                           = 14
L2 = L1P // 2              # after mp1_2 / mp1_3 (on i1)         = 7
LO5 = L1P - K2 + 1         # conv2 on i1p  output length         = 10
LO3 = L2 - K2 + 1          # conv2 on i1pp output length         = 3
LO2 = L2 - K22 + 1         # conv2_2 on i1pp output length       = 6
E5 = LO5 // 2              # = 5
E3 = LO3 // 2              # = 1
E2 = LO2 // 2              # = 3

HL1P = H1 * L1P            # 224  (lane layout of i1p:  lane = o*L1P + p)
HL2 = H1 * L2              # 112  (lane layout of i1pp: lane = o*L2  + q)

# ---- constant-slab layouts (shared by host packer and kernel) ----
# s2slab [HL1P, S2_COLS]: [ selp2_even | selp2_odd | conv2+mp2 even | odd ]
S2_W5 = 2 * HL2                      # 224
S2_COLS = 2 * HL2 + 2 * E5           # 234
# hslab [HL2, HS_COLS]: small head constants packed into one slab
HS_W23 = 0
HS_W23_W = 2 + 2 * E2                # 8   (branch-3 cols 0:2 | branch-2 even | odd)
HS_GQ = HS_W23 + HS_W23_W            # 8
HS_WSYM = HS_GQ + SYM                # 11
HS_BSYM = HS_WSYM + NUM_LABELS       # 15
HS_B1P = 32                          # pooled conv1 bias row lives at row 0, lanes 32:256
HS_COLS = HS_B1P + HL1P              # 256
HS_ROWS = HL2                        # 112

OUT_LOSS = NUM_LABELS + SYM          # lane 7 of the packed output tile


# ---------------- one-time parameter preparation (NOT per-call) ----------------
def prepare_params(params):
    """Fold conv weights + max-pools into dense Toeplitz matmul operands.

    Runs once when parameters are loaded; everything here is host-side numpy.
    """
    w1 = np.asarray(params['w1'], np.float32)     # [H1, S, K1]
    b1 = np.asarray(params['b1'], np.float32)     # [H1]
    w2 = np.asarray(params['w2'], np.float32)     # [1, H1, K2]
    b2 = np.asarray(params['b2'], np.float32)     # [1]
    w22 = np.asarray(params['w22'], np.float32)   # [1, H1, K22]
    b22 = np.asarray(params['b22'], np.float32)   # [1]
    wsym = np.asarray(params['wsym'], np.float32) # [NUM_LABELS, SYM]
    bsym = np.asarray(params['bsym'], np.float32) # [NUM_LABELS]

    # conv1 (S->H1, k=5) fused with mp1: even/odd Toeplitz halves, max in-kernel.
    # xr lane layout: lane = c*D + d ; i1p lane layout: lane = o*L1P + p.
    w1e = np.zeros((S * D, HL1P), np.float32)
    w1o = np.zeros((S * D, HL1P), np.float32)
    for o in range(H1):
        for c in range(S):
            for k in range(K1):
                for p in range(L1P):
                    w1e[c * D + 2 * p + k,     o * L1P + p] = w1[o, c, k]
                    w1o[c * D + 2 * p + 1 + k, o * L1P + p] = w1[o, c, k]
    w1slab = np.concatenate([w1e, w1o], axis=1)                     # [256, 448]
    b1p = np.repeat(b1, L1P).reshape(1, HL1P)                       # [1, 224]

    # mp1_2 / mp1_3 (on i1p) as even/odd 0/1 selection matrices.
    selp2 = np.zeros((2, HL1P, HL2), np.float32)
    for o in range(H1):
        for q in range(L2):
            selp2[0, o * L1P + 2 * q,     o * L2 + q] = 1.0
            selp2[1, o * L1P + 2 * q + 1, o * L2 + q] = 1.0

    # conv2 (H1->1, k=5) on i1p fused with mp2 (10 -> 5).
    w5 = np.zeros((2, HL1P, E5), np.float32)
    for o in range(H1):
        for k in range(K2):
            for m in range(E5):
                w5[0, o * L1P + 2 * m + k,     m] = w2[0, o, k]
                w5[1, o * L1P + 2 * m + 1 + k, m] = w2[0, o, k]

    s2slab = np.zeros((HL1P, S2_COLS), np.float32)                  # [224, 234]
    s2slab[:, 0:HL2] = selp2[0]
    s2slab[:, HL2:2 * HL2] = selp2[1]
    s2slab[:, S2_W5:S2_W5 + E5] = w5[0]
    s2slab[:, S2_W5 + E5:S2_W5 + 2 * E5] = w5[1]

    # conv2 (k=5) on i1pp (len 7 -> 3); mp2 keeps max of first two columns only.
    w3 = np.zeros((HL2, 2), np.float32)
    for o in range(H1):
        for k in range(K2):
            for j in range(2):
                w3[o * L2 + j + k, j] = w2[0, o, k]

    # conv2_2 (k=2) on i1pp (len 7 -> 6) fused with mp2_2 (6 -> 3).
    w2f = np.zeros((2, HL2, E2), np.float32)
    for o in range(H1):
        for k in range(K22):
            for m in range(E2):
                w2f[0, o * L2 + 2 * m + k,     m] = w22[0, o, k]
                w2f[1, o * L2 + 2 * m + 1 + k, m] = w22[0, o, k]

    w23slab = np.concatenate([w3, w2f[0], w2f[1]], axis=1)          # [112, 8]

    # group-mean matrix: picks each symptom's Q question columns and applies
    # the mean over questions and the final /3 across the three branches.
    gq = np.zeros((NT, SYM), np.float32)
    for s in range(SYM):
        gq[B + s * Q:B + (s + 1) * Q, s] = 1.0 / (Q * 3)

    hslab = np.zeros((HS_ROWS, HS_COLS), np.float32)                # [112, 256]
    hslab[:, HS_W23:HS_W23 + HS_W23_W] = w23slab
    hslab[0:NT, HS_GQ:HS_GQ + SYM] = gq
    hslab[0:SYM, HS_WSYM:HS_WSYM + NUM_LABELS] = wsym.T
    hslab[0:1, HS_BSYM:HS_BSYM + NUM_LABELS] = bsym.reshape(1, NUM_LABELS)
    hslab[0:1, HS_B1P:HS_B1P + HL1P] = b1p

    bscal = np.concatenate([b2, b22]).astype(np.float32)            # (2,)

    return dict(w1slab=jnp.asarray(w1slab), s2slab=jnp.asarray(s2slab),
                hslab=jnp.asarray(hslab), bscal=jnp.asarray(bscal))


# ---------------- the single fused kernel ----------------
def fused_kernel(xr_ref, oh_ref, w1_ref, s2_ref, hs_ref, bscal_ref, out_ref):
    f32 = jnp.float32
    x = xr_ref[...]                                             # [NT, S*D]
    b1p = hs_ref[0:1, HS_B1P:HS_B1P + HL1P]                     # [1, 224]

    # conv1 + mp1: one Toeplitz matmul -> even|odd halves -> max -> + bias.
    y1 = jnp.dot(x, w1_ref[...], preferred_element_type=f32)   # [NT, 448]
    i1p = jnp.maximum(y1[:, 0:HL1P], y1[:, HL1P:2 * HL1P]) + b1p   # [NT, 224]

    # mp1_2/mp1_3 (i1pp) and conv2+mp2 "branch 5" share i1p: one matmul.
    y2 = jnp.dot(i1p, s2_ref[...], preferred_element_type=f32)  # [NT, 234]
    i1pp = jnp.maximum(y2[:, 0:HL2], y2[:, HL2:2 * HL2])        # [NT, 112]
    b2 = bscal_ref[0]
    b22 = bscal_ref[1]
    e5 = jnp.maximum(y2[:, S2_W5:S2_W5 + E5],
                     y2[:, S2_W5 + E5:S2_W5 + 2 * E5]) + b2     # [NT, 5]

    # branches "3" (conv2 on i1pp) and "2" (conv2_2 on i1pp): one matmul.
    y3 = jnp.dot(i1pp, hs_ref[:, HS_W23:HS_W23 + HS_W23_W],
                 preferred_element_type=f32)                    # [NT, 8]
    e3 = jnp.maximum(y3[:, 0:1], y3[:, 1:2]) + b2               # [NT, 1]
    e2 = jnp.maximum(y3[:, 2:2 + E2], y3[:, 2 + E2:2 + 2 * E2]) + b22  # [NT, 3]

    # ---- cosine-similarity head (all-pairs; eps clamp on product of norms) ----
    def cos_all(e):
        dots = lax.dot_general(e, e, (((1,), (1,)), ((), ())),
                               preferred_element_type=f32)      # [NT, NT]
        nrm = jnp.sqrt(jnp.sum(e * e, axis=1, keepdims=True))   # [NT, 1]
        den = lax.dot_general(nrm, nrm, (((1,), (1,)), ((), ())),
                              preferred_element_type=f32)       # [NT, NT]
        return dots * pl.reciprocal(jnp.maximum(den, EPS), approx=True)

    cos_sum = cos_all(e5) + cos_all(e2) + cos_all(e3)           # [NT, NT]
    dist_all = jnp.dot(cos_sum, hs_ref[0:NT, HS_GQ:HS_GQ + SYM],
                       preferred_element_type=f32)              # [NT, SYM]
    distance = dist_all[0:B, :]                                 # [B, SYM]

    # sym_layer + softmax(dim=1)
    wsymT = hs_ref[0:SYM, HS_WSYM:HS_WSYM + NUM_LABELS]         # [SYM, NL]
    bsym = hs_ref[0:1, HS_BSYM:HS_BSYM + NUM_LABELS]            # [1, NL]
    logits = jnp.dot(distance, wsymT, preferred_element_type=f32) + bsym
    m = jnp.max(logits, axis=1, keepdims=True)
    ex = jnp.exp(logits - m)
    probs = ex * pl.reciprocal(jnp.sum(ex, axis=1, keepdims=True), approx=True)

    # CrossEntropyLoss (mean) on the already-softmaxed `out` (original bug kept).
    mm = jnp.max(probs, axis=1, keepdims=True)
    lse = mm + jnp.log(jnp.sum(jnp.exp(probs - mm), axis=1, keepdims=True))
    tgt = jnp.sum(probs * oh_ref[...], axis=1, keepdims=True)
    loss2 = jnp.sum(lse - tgt, axis=0, keepdims=True) * (1.0 / B)   # [1, 1]
    losscol = loss2 + jnp.zeros((B, 1), f32)                        # [B, 1]

    # single lane-dense (8,128) packed output tile: [probs | dist | loss | 0...]
    row = jnp.concatenate([probs, distance, losscol], axis=1)       # [B, 8]
    row = jnp.concatenate(
        [row, jnp.zeros((B, 128 - (NUM_LABELS + SYM + 1)), f32)], axis=1)
    out_ref[...] = jnp.concatenate([row, jnp.zeros((8 - B, 128), f32)], axis=0)


# ---------------- per-call wrapper (runtime work only) ----------------
@jax.jit
def depression_question_forward(prep, input1, question_embeddings, labels):
    """input1: [B, S, D] (precomputed BERT last_hidden_state)
       question_embeddings: [SYM, Q, S, D]
       prep: output of prepare_params (built once, not per call)."""
    q_flat = question_embeddings.reshape(SYM * Q, S, D)
    x_all = jnp.concatenate([input1, q_flat], axis=0)          # [NT, S, D]
    xr = x_all.reshape(NT, S * D)                              # [14, 256]
    onehot = jax.nn.one_hot(labels, NUM_LABELS, dtype=jnp.float32)

    vmem = pl.BlockSpec(memory_space=pltpu.MemorySpace.VMEM)
    smem = pl.BlockSpec(memory_space=pltpu.MemorySpace.SMEM)
    packed = pl.pallas_call(
        fused_kernel,
        in_specs=[vmem, vmem, vmem, vmem, vmem, smem],
        out_shape=jax.ShapeDtypeStruct((8, 128), jnp.float32),
        cost_estimate=pl.CostEstimate(flops=5_000_000, transcendentals=1_000,
                                      bytes_accessed=900_000),
    )(xr, onehot, prep['w1slab'], prep['s2slab'], prep['hslab'], prep['bscal'])

    loss = packed[0, OUT_LOSS]
    out = packed[0:B, 0:NUM_LABELS]
    dist = packed[0:B, NUM_LABELS:NUM_LABELS + SYM]
    return loss, out, dist


# ---------------- pure-JAX reference for validation ----------------
def _ref_conv1d(x, w, b):
    N, C, L = x.shape
    O, _, K = w.shape
    Lo = L - K + 1
    cols = jnp.stack([x[:, :, k:k + Lo] for k in range(K)], axis=-1)
    return jnp.einsum('nclk,ock->nol', cols, w) + b[None, :, None]


def _ref_pool2(x):
    Lo = x.shape[-1] // 2
    return jnp.maximum(x[..., 0:2 * Lo:2], x[..., 1:2 * Lo:2])


def ref_forward(input1, q_embs, p, labels):
    def enc(x):
        i1 = _ref_pool2(_ref_conv1d(x, p['w1'], p['b1']))
        i1pp = _ref_pool2(i1)
        e5 = _ref_pool2(_ref_conv1d(i1, p['w2'], p['b2']))[:, 0, :]
        e3 = _ref_pool2(_ref_conv1d(i1pp, p['w2'], p['b2']))[:, 0, :]
        e2 = _ref_pool2(_ref_conv1d(i1pp, p['w22'], p['b22']))[:, 0, :]
        return e5, e2, e3

    e15, e12, e13 = enc(input1)

    def cos(a, b_):
        dots = a @ b_.T
        na = jnp.linalg.norm(a, axis=1, keepdims=True)
        nb = jnp.linalg.norm(b_, axis=1, keepdims=True)
        return dots / jnp.maximum(na * nb.T, EPS)

    dcols = []
    for s in range(SYM):
        q5, q2, q3 = enc(q_embs[s])
        d5 = jnp.mean(cos(e15, q5), axis=1)
        d2 = jnp.mean(cos(e12, q2), axis=1)
        d3 = jnp.mean(cos(e13, q3), axis=1)
        dcols.append((d2 + d3 + d5) / 3.0)
    distance = jnp.stack(dcols, axis=-1)
    logits = distance @ p['wsym'].T + p['bsym']
    probs = jax.nn.softmax(logits, axis=1)
    onehot = jax.nn.one_hot(labels, NUM_LABELS, dtype=jnp.float32)
    lse = jax.scipy.special.logsumexp(probs, axis=1)
    loss = jnp.mean(lse - jnp.sum(probs * onehot, axis=1))
    return loss, probs, distance


if __name__ == "__main__":
    key = jax.random.PRNGKey(0)
    ks = jax.random.split(key, 12)
    input1 = jax.random.normal(ks[0], (B, S, D), jnp.float32)
    q_embs = jax.random.normal(ks[1], (SYM, Q, S, D), jnp.float32)
    labels = jax.random.randint(ks[2], (B,), 0, NUM_LABELS)
    params = {
        'w1':  0.1 * jax.random.normal(ks[3], (H1, S, K1), jnp.float32),
        'b1':  0.1 * jax.random.normal(ks[4], (H1,), jnp.float32),
        'w2':  0.1 * jax.random.normal(ks[5], (1, H1, K2), jnp.float32),
        'b2':  0.1 * jax.random.normal(ks[6], (1,), jnp.float32),
        'w22': 0.1 * jax.random.normal(ks[7], (1, H1, K22), jnp.float32),
        'b22': 0.1 * jax.random.normal(ks[8], (1,), jnp.float32),
        'wsym': 0.1 * jax.random.normal(ks[9], (NUM_LABELS, SYM), jnp.float32),
        'bsym': 0.1 * jax.random.normal(ks[10], (NUM_LABELS,), jnp.float32),
    }
    # TODO(synk): BERT / sentence encoder + tokenizer + question-cache file I/O
    # have no Pallas equivalent; their outputs are modeled as random inputs.

    prep = prepare_params(params)        # one-time host-side weight folding

    loss, out, dist = depression_question_forward(prep, input1, q_embs, labels)
    jax.block_until_ready((loss, out, dist))

    rl, ro, rd = ref_forward(input1, q_embs, params, labels)
    # tolerances relaxed slightly vs the exact-division version because the
    # kernel uses the EUP approximate reciprocal (per the performance review).
    np.testing.assert_allclose(np.asarray(dist), np.asarray(rd), rtol=5e-3, atol=2e-3)
    np.testing.assert_allclose(np.asarray(out), np.asarray(ro), rtol=5e-3, atol=2e-3)
    np.testing.assert_allclose(float(loss), float(rl), rtol=5e-3, atol=2e-3)
    print("KERNEL_OK")
</pallas_src>

<mosaic_0001>
module attributes {stable_mosaic.version = 11 : i64} {
  func.func @fused_kernel(%arg0: memref<14x256xf32, #tpu.memory_space<vmem>>, %arg1: memref<2x4xf32, #tpu.memory_space<vmem>>, %arg2: memref<256x448xf32, #tpu.memory_space<vmem>>, %arg3: memref<224x234xf32, #tpu.memory_space<vmem>>, %arg4: memref<112x256xf32, #tpu.memory_space<vmem>>, %arg5: memref<2xf32, #tpu.memory_space<smem>>, %arg6: memref<8x128xf32, #tpu.memory_space<vmem>>) attributes {dimension_semantics = [], scalar_prefetch = 0 : i64, scratch_operands = 0 : i64, tpu.core_type = #tpu.core_type<tc>} {
    %c0 = arith.constant 0 : index
    %c0_0 = arith.constant 0 : index
    %0 = vector.load %arg0[%c0, %c0_0] : memref<14x256xf32, #tpu.memory_space<vmem>>, vector<14x256xf32>
    %c0_1 = arith.constant 0 : index
    %c32 = arith.constant 32 : index
    %1 = vector.load %arg4[%c0_1, %c32] : memref<112x256xf32, #tpu.memory_space<vmem>>, vector<1x224xf32>
    %c0_2 = arith.constant 0 : index
    %c0_3 = arith.constant 0 : index
    %2 = vector.load %arg2[%c0_2, %c0_3] : memref<256x448xf32, #tpu.memory_space<vmem>>, vector<256x448xf32>
    %cst = arith.constant dense<0.000000e+00> : vector<14x448xf32>
    %3 = tpu.matmul %0, %2, %cst {dimension_numbers = #tpu.dot_dimension_numbers<[1], [0], [0], [1], [0, 0, 1, 1], [], []>} : vector<14x256xf32>, vector<256x448xf32>, vector<14x448xf32> -> vector<14x448xf32>
    %4 = vector.extract_strided_slice %3 {offsets = [0, 0], sizes = [14, 224], strides = [1, 1]} : vector<14x448xf32> to vector<14x224xf32>
    %5 = vector.extract_strided_slice %3 {offsets = [0, 224], sizes = [14, 224], strides = [1, 1]} : vector<14x448xf32> to vector<14x224xf32>
    %6 = arith.maximumf %4, %5 : vector<14x224xf32>
    %7 = vector.broadcast %1 : vector<1x224xf32> to vector<14x224xf32>
    %8 = arith.addf %6, %7 : vector<14x224xf32>
    %c0_4 = arith.constant 0 : index
    %c0_5 = arith.constant 0 : index
    %9 = vector.load %arg3[%c0_4, %c0_5] : memref<224x234xf32, #tpu.memory_space<vmem>>, vector<224x234xf32>
    %cst_6 = arith.constant dense<0.000000e+00> : vector<14x234xf32>
    %10 = tpu.matmul %8, %9, %cst_6 {dimension_numbers = #tpu.dot_dimension_numbers<[1], [0], [0], [1], [0, 0, 1, 1], [], []>} : vector<14x224xf32>, vector<224x234xf32>, vector<14x234xf32> -> vector<14x234xf32>
    %11 = vector.extract_strided_slice %10 {offsets = [0, 0], sizes = [14, 112], strides = [1, 1]} : vector<14x234xf32> to vector<14x112xf32>
    %12 = vector.extract_strided_slice %10 {offsets = [0, 112], sizes = [14, 112], strides = [1, 1]} : vector<14x234xf32> to vector<14x112xf32>
    %13 = arith.maximumf %11, %12 : vector<14x112xf32>
    %c0_7 = arith.constant 0 : index
    %14 = memref.load %arg5[%c0_7] : memref<2xf32, #tpu.memory_space<smem>>
    %c1 = arith.constant 1 : index
    %15 = memref.load %arg5[%c1] : memref<2xf32, #tpu.memory_space<smem>>
    %16 = vector.extract_strided_slice %10 {offsets = [0, 224], sizes = [14, 5], strides = [1, 1]} : vector<14x234xf32> to vector<14x5xf32>
    %17 = vector.extract_strided_slice %10 {offsets = [0, 229], sizes = [14, 5], strides = [1, 1]} : vector<14x234xf32> to vector<14x5xf32>
    %18 = arith.maximumf %16, %17 : vector<14x5xf32>
    %19 = vector.broadcast %14 : f32 to vector<14x5xf32>
    %20 = arith.addf %18, %19 : vector<14x5xf32>
    %c0_8 = arith.constant 0 : index
    %c0_9 = arith.constant 0 : index
    %21 = vector.load %arg4[%c0_8, %c0_9] : memref<112x256xf32, #tpu.memory_space<vmem>>, vector<112x8xf32>
    %cst_10 = arith.constant dense<0.000000e+00> : vector<14x8xf32>
    %22 = tpu.matmul %13, %21, %cst_10 {dimension_numbers = #tpu.dot_dimension_numbers<[1], [0], [0], [1], [0, 0, 1, 1], [], []>} : vector<14x112xf32>, vector<112x8xf32>, vector<14x8xf32> -> vector<14x8xf32>
    %23 = vector.extract_strided_slice %22 {offsets = [0, 0], sizes = [14, 1], strides = [1, 1]} : vector<14x8xf32> to vector<14x1xf32>
    %24 = vector.extract_strided_slice %22 {offsets = [0, 1], sizes = [14, 1], strides = [1, 1]} : vector<14x8xf32> to vector<14x1xf32>
    %25 = arith.maximumf %23, %24 : vector<14x1xf32>
    %26 = vector.broadcast %14 : f32 to vector<14x1xf32>
    %27 = arith.addf %25, %26 : vector<14x1xf32>
    %28 = vector.extract_strided_slice %22 {offsets = [0, 2], sizes = [14, 3], strides = [1, 1]} : vector<14x8xf32> to vector<14x3xf32>
    %29 = vector.extract_strided_slice %22 {offsets = [0, 5], sizes = [14, 3], strides = [1, 1]} : vector<14x8xf32> to vector<14x3xf32>
    %30 = arith.maximumf %28, %29 : vector<14x3xf32>
    %31 = vector.broadcast %15 : f32 to vector<14x3xf32>
    %32 = arith.addf %30, %31 : vector<14x3xf32>
    %cst_11 = arith.constant dense<0.000000e+00> : vector<14x14xf32>
    %33 = tpu.matmul %20, %20, %cst_11 {dimension_numbers = #tpu.dot_dimension_numbers<[1], [1], [0], [0], [0, 0, 1, 0], [], []>} : vector<14x5xf32>, vector<14x5xf32>, vector<14x14xf32> -> vector<14x14xf32>
    %34 = arith.mulf %20, %20 : vector<14x5xf32>
    %cst_12 = arith.constant dense<0.000000e+00> : vector<14xf32>
    %35 = vector.multi_reduction <add>, %34, %cst_12 [1] : vector<14x5xf32> to vector<14xf32>
    %36 = vector.shape_cast %35 : vector<14xf32> to vector<14x1xf32>
    %37 = math.sqrt %36 : vector<14x1xf32>
    %cst_13 = arith.constant dense<0.000000e+00> : vector<14x14xf32>
    %38 = tpu.matmul %37, %37, %cst_13 {dimension_numbers = #tpu.dot_dimension_numbers<[1], [1], [0], [0], [0, 0, 1, 0], [], []>} : vector<14x1xf32>, vector<14x1xf32>, vector<14x14xf32> -> vector<14x14xf32>
    %cst_14 = arith.constant 9.99999993E-9 : f32
    %39 = vector.broadcast %cst_14 : f32 to vector<14x14xf32>
    %40 = arith.maximumf %38, %39 : vector<14x14xf32>
    %41 = tpu.reciprocal %40 {approx = true} : vector<14x14xf32> -> vector<14x14xf32>
    %42 = arith.mulf %33, %41 : vector<14x14xf32>
    %cst_15 = arith.constant dense<0.000000e+00> : vector<14x14xf32>
    %43 = tpu.matmul %32, %32, %cst_15 {dimension_numbers = #tpu.dot_dimension_numbers<[1], [1], [0], [0], [0, 0, 1, 0], [], []>} : vector<14x3xf32>, vector<14x3xf32>, vector<14x14xf32> -> vector<14x14xf32>
    %44 = arith.mulf %32, %32 : vector<14x3xf32>
    %cst_16 = arith.constant dense<0.000000e+00> : vector<14xf32>
    %45 = vector.multi_reduction <add>, %44, %cst_16 [1] : vector<14x3xf32> to vector<14xf32>
    %46 = vector.shape_cast %45 : vector<14xf32> to vector<14x1xf32>
    %47 = math.sqrt %46 : vector<14x1xf32>
    %cst_17 = arith.constant dense<0.000000e+00> : vector<14x14xf32>
    %48 = tpu.matmul %47, %47, %cst_17 {dimension_numbers = #tpu.dot_dimension_numbers<[1], [1], [0], [0], [0, 0, 1, 0], [], []>} : vector<14x1xf32>, vector<14x1xf32>, vector<14x14xf32> -> vector<14x14xf32>
    %cst_18 = arith.constant 9.99999993E-9 : f32
    %49 = vector.broadcast %cst_18 : f32 to vector<14x14xf32>
    %50 = arith.maximumf %48, %49 : vector<14x14xf32>
    %51 = tpu.reciprocal %50 {approx = true} : vector<14x14xf32> -> vector<14x14xf32>
    %52 = arith.mulf %43, %51 : vector<14x14xf32>
    %53 = arith.addf %42, %52 : vector<14x14xf32>
    %cst_19 = arith.constant dense<0.000000e+00> : vector<14x14xf32>
    %54 = tpu.matmul %27, %27, %cst_19 {dimension_numbers = #tpu.dot_dimension_numbers<[1], [1], [0], [0], [0, 0, 1, 0], [], []>} : vector<14x1xf32>, vector<14x1xf32>, vector<14x14xf32> -> vector<14x14xf32>
    %55 = arith.mulf %27, %27 : vector<14x1xf32>
    %cst_20 = arith.constant dense<0.000000e+00> : vector<14xf32>
    %56 = vector.multi_reduction <add>, %55, %cst_20 [1] : vector<14x1xf32> to vector<14xf32>
    %57 = vector.shape_cast %56 : vector<14xf32> to vector<14x1xf32>
    %58 = math.sqrt %57 : vector<14x1xf32>
    %cst_21 = arith.constant dense<0.000000e+00> : vector<14x14xf32>
    %59 = tpu.matmul %58, %58, %cst_21 {dimension_numbers = #tpu.dot_dimension_numbers<[1], [1], [0], [0], [0, 0, 1, 0], [], []>} : vector<14x1xf32>, vector<14x1xf32>, vector<14x14xf32> -> vector<14x14xf32>
    %cst_22 = arith.constant 9.99999993E-9 : f32
    %60 = vector.broadcast %cst_22 : f32 to vector<14x14xf32>
    %61 = arith.maximumf %59, %60 : vector<14x14xf32>
    %62 = tpu.reciprocal %61 {approx = true} : vector<14x14xf32> -> vector<14x14xf32>
    %63 = arith.mulf %54, %62 : vector<14x14xf32>
    %64 = arith.addf %53, %63 : vector<14x14xf32>
    %c0_23 = arith.constant 0 : index
    %c8 = arith.constant 8 : index
    %65 = vector.load %arg4[%c0_23, %c8] : memref<112x256xf32, #tpu.memory_space<vmem>>, vector<14x3xf32>
    %cst_24 = arith.constant dense<0.000000e+00> : vector<14x3xf32>
    %66 = tpu.matmul %64, %65, %cst_24 {dimension_numbers = #tpu.dot_dimension_numbers<[1], [0], [0], [1], [0, 0, 1, 1], [], []>} : vector<14x14xf32>, vector<14x3xf32>, vector<14x3xf32> -> vector<14x3xf32>
    %67 = vector.extract_strided_slice %66 {offsets = [0, 0], sizes = [2, 3], strides = [1, 1]} : vector<14x3xf32> to vector<2x3xf32>
    %c0_25 = arith.constant 0 : index
    %c11 = arith.constant 11 : index
    %68 = vector.load %arg4[%c0_25, %c11] : memref<112x256xf32, #tpu.memory_space<vmem>>, vector<3x4xf32>
    %c0_26 = arith.constant 0 : index
    %c15 = arith.constant 15 : index
    %69 = vector.load %arg4[%c0_26, %c15] : memref<112x256xf32, #tpu.memory_space<vmem>>, vector<1x4xf32>
    %cst_27 = arith.constant dense<0.000000e+00> : vector<2x4xf32>
    %70 = tpu.matmul %67, %68, %cst_27 {dimension_numbers = #tpu.dot_dimension_numbers<[1], [0], [0], [1], [0, 0, 1, 1], [], []>} : vector<2x3xf32>, vector<3x4xf32>, vector<2x4xf32> -> vector<2x4xf32>
    %71 = vector.broadcast %69 : vector<1x4xf32> to vector<2x4xf32>
    %72 = arith.addf %70, %71 : vector<2x4xf32>
    %cst_28 = arith.constant dense<0xFF800000> : vector<2xf32>
    %73 = vector.multi_reduction <maximumf>, %72, %cst_28 [1] : vector<2x4xf32> to vector<2xf32>
    %74 = vector.shape_cast %73 : vector<2xf32> to vector<2x1xf32>
    %75 = vector.broadcast %74 : vector<2x1xf32> to vector<2x4xf32>
    %76 = arith.subf %72, %75 : vector<2x4xf32>
    %77 = math.exp %76 : vector<2x4xf32>
    %cst_29 = arith.constant dense<0.000000e+00> : vector<2xf32>
    %78 = vector.multi_reduction <add>, %77, %cst_29 [1] : vector<2x4xf32> to vector<2xf32>
    %79 = vector.shape_cast %78 : vector<2xf32> to vector<2x1xf32>
    %80 = tpu.reciprocal %79 {approx = true} : vector<2x1xf32> -> vector<2x1xf32>
    %81 = vector.broadcast %80 : vector<2x1xf32> to vector<2x4xf32>
    %82 = arith.mulf %77, %81 : vector<2x4xf32>
    %cst_30 = arith.constant dense<0xFF800000> : vector<2xf32>
    %83 = vector.multi_reduction <maximumf>, %82, %cst_30 [1] : vector<2x4xf32> to vector<2xf32>
    %84 = vector.shape_cast %83 : vector<2xf32> to vector<2x1xf32>
    %85 = vector.broadcast %84 : vector<2x1xf32> to vector<2x4xf32>
    %86 = arith.subf %82, %85 : vector<2x4xf32>
    %87 = math.exp %86 : vector<2x4xf32>
    %cst_31 = arith.constant dense<0.000000e+00> : vector<2xf32>
    %88 = vector.multi_reduction <add>, %87, %cst_31 [1] : vector<2x4xf32> to vector<2xf32>
    %89 = vector.shape_cast %88 : vector<2xf32> to vector<2x1xf32>
    %90 = math.log %89 : vector<2x1xf32>
    %91 = arith.addf %84, %90 : vector<2x1xf32>
    %c0_32 = arith.constant 0 : index
    %c0_33 = arith.constant 0 : index
    %92 = vector.load %arg1[%c0_32, %c0_33] : memref<2x4xf32, #tpu.memory_space<vmem>>, vector<2x4xf32>
    %93 = arith.mulf %82, %92 : vector<2x4xf32>
    %cst_34 = arith.constant dense<0.000000e+00> : vector<2xf32>
    %94 = vector.multi_reduction <add>, %93, %cst_34 [1] : vector<2x4xf32> to vector<2xf32>
    %95 = vector.shape_cast %94 : vector<2xf32> to vector<2x1xf32>
    %96 = arith.subf %91, %95 : vector<2x1xf32>
    %cst_35 = arith.constant dense<0.000000e+00> : vector<1xf32>
    %97 = vector.multi_reduction <add>, %96, %cst_35 [0] : vector<2x1xf32> to vector<1xf32>
    %98 = vector.shape_cast %97 : vector<1xf32> to vector<1x1xf32>
    %cst_36 = arith.constant 5.000000e-01 : f32
    %99 = vector.broadcast %cst_36 : f32 to vector<1x1xf32>
    %100 = arith.mulf %98, %99 : vector<1x1xf32>
    %cst_37 = arith.constant 0.000000e+00 : f32
    %101 = vector.broadcast %cst_37 : f32 to vector<2x1xf32>
    %102 = vector.broadcast %100 : vector<1x1xf32> to vector<2x1xf32>
    %103 = arith.addf %102, %101 : vector<2x1xf32>
    %104 = tpu.concatenate %82, %67, %103 in 1 : vector<2x4xf32>, vector<2x3xf32>, vector<2x1xf32> -> vector<2x8xf32>
    %cst_38 = arith.constant 0.000000e+00 : f32
    %105 = vector.broadcast %cst_38 : f32 to vector<2x120xf32>
    %106 = tpu.concatenate %104, %105 in 1 : vector<2x8xf32>, vector<2x120xf32> -> vector<2x128xf32>
    %cst_39 = arith.constant 0.000000e+00 : f32
    %107 = vector.broadcast %cst_39 : f32 to vector<6x128xf32>
    %108 = tpu.concatenate %106, %107 in 0 : vector<2x128xf32>, vector<6x128xf32> -> vector<8x128xf32>
    %c0_40 = arith.constant 0 : index
    %c0_41 = arith.constant 0 : index
    %109 = vector.load %arg6[%c0_40, %c0_41] : memref<8x128xf32, #tpu.memory_space<vmem>>, vector<8x128xf32>
    tpu.vector_store %arg6[%c0_40, %c0_41], %108 {strides = array<i32>} : memref<8x128xf32, #tpu.memory_space<vmem>>, vector<8x128xf32>,
    return
  }
}

</mosaic_0001>

<llo_original>
// kernel: depression_question_forward.1
$region0: #{depression_question_forward.1}
  #allocation0 [shape = 'u32[]', space=smem, size = 0x4, offset = 0x4, fixed_abs, tag = 'smem constant byte address 0x4 - core index']
  #allocation1 [shape = 'u32[144,128]{1,0:T(1,128)}', space=vmem, size = 0x12000, scoped, tag = 'internal scratch']
  %s0 = inlined_call_operand.vmem [shape: f32[14,256], index: 0, kind: input, shape index: {}]
  %s1 = inlined_call_operand.vmem [shape: f32[2,4], index: 1, kind: input, shape index: {}]
  %s2 = inlined_call_operand.vmem [shape: f32[256,448], index: 2, kind: input, shape index: {}]
  %s3 = inlined_call_operand.vmem [shape: f32[224,234], index: 3, kind: input, shape index: {}]
  %s4 = inlined_call_operand.vmem [shape: f32[112,256], index: 4, kind: input, shape index: {}]
  %s5 = inlined_call_operand.vmem [shape: f32[2], index: 5, kind: input, shape index: {}]
  %s6 = inlined_call_operand.vmem [shape: f32[8,128], index: 6, kind: output, shape index: {}]
  %s7 = sld [smem:[#allocation0]]
  $region38: #{depression_question_forward.1} parent=0
    _
  %s9 = ssub.s32 1, %s7
  %s10 = scalar_select 0, %s9, %s7
  $region1: #{depression_question_forward.1} parent=0
    #allocation2 [shape = 'u8[512]{0}', space=smem, size = 0x200, scoped, tag = 'input window, operand 5, single buffered']
    #allocation3 [shape = 's32[1]{0}', space=sflag, size = 0x4, scoped, tag = 'scoped memory for depression_question_forward.1']
    %11 = vsyncpa [#allocation3], 0
    // Predicated region
    $region2: #{depression_question_forward.1} parent=1 // pred_check
      _
    $region3: #{depression_question_forward.1} parent=1 // pred_check_branch
      %13 = sbr.rel (0) target = $region5
    $region4: #{depression_question_forward.1} parent=1 // pred_region
      _
    $region5: #{depression_question_forward.1} parent=1 // pred_fallthru
      _
    // Predicated region
    $region6: #{depression_question_forward.1} parent=1 // pred_check
      _
    $region7: #{depression_question_forward.1} parent=1 // pred_check_branch
      %15 = sbr.rel (0) target = $region9
    $region8: #{depression_question_forward.1} parent=1 // pred_region
      _
    $region9: #{depression_question_forward.1} parent=1 // pred_fallthru
      _
    // Predicated region
    $region10: #{depression_question_forward.1} parent=1 // pred_check
      _
    $region11: #{depression_question_forward.1} parent=1 // pred_check_branch
      %17 = sbr.rel (0) target = $region13
    $region12: #{depression_question_forward.1} parent=1 // pred_region
      _
    $region13: #{depression_question_forward.1} parent=1 // pred_fallthru
      _
    // Predicated region
    $region14: #{depression_question_forward.1} parent=1 // pred_check
      _
    $region15: #{depression_question_forward.1} parent=1 // pred_check_branch
      %19 = sbr.rel (0) target = $region17
    $region16: #{depression_question_forward.1} parent=1 // pred_region
      _
    $region17: #{depression_question_forward.1} parent=1 // pred_fallthru
      _
    // Predicated region
    $region18: #{depression_question_forward.1} parent=1 // pred_check
      _
    $region19: #{depression_question_forward.1} parent=1 // pred_check_branch
      %21 = sbr.rel (0) target = $region21
    $region20: #{depression_question_forward.1} parent=1 // pred_region
      _
    $region21: #{depression_question_forward.1} parent=1 // pred_fallthru
      _
    // Predicated region
    $region22: #{depression_question_forward.1} parent=1 // pred_check
      _
    $region23: #{depression_question_forward.1} parent=1 // pred_check_branch
      %23 = sbr.rel (0) target = $region25
    $region24: #{depression_question_forward.1} parent=1 // pred_region
      %s25 = ssub.s32 16, 16
      %26 = vsyncadd [#allocation3], %s25
      %s28 = sshll.u32 %s5, 4
      %s29 = int_to_ptr.vmem [resolvable:$true] %s28
      %31 = dma.vmem_to_smem %s29, 16, [#allocation2], [#allocation3]
    $region25: #{depression_question_forward.1} parent=1 // pred_fallthru
      _
    // Predicated region
    $region26: #{depression_question_forward.1} parent=1 // pred_check
      _
    $region27: #{depression_question_forward.1} parent=1 // pred_check_branch
      %33 = sbr.rel (0) target = $region29
    $region28: #{depression_question_forward.1} parent=1 // pred_region
      %34 = dma.done [#allocation3], 16
    $region29: #{depression_question_forward.1} parent=1 // pred_fallthru
      _
    %35 = sfence
    %v36 = vld [vmem:[%s0] sm:$0xff]
    %v37 = vld [vmem:[%s0 + $0x8] sm:$0xff]
    %v38 = vld [vmem:[%s0 + $0x10] sm:$0x3f]
    %v39 = vld [vmem:[%s0 + $0x18] sm:$0x3f]
    %v40 = vld [vmem:[%s4] ss:$8 sm:$0x3]
    %v41 = vld [vmem:[%s2] sm:$0xff]
    %v42 = vld [vmem:[%s2 + $0x8] sm:$0xff]
    %v43 = vld [vmem:[%s2 + $0x10] sm:$0xff]
    %v44 = vld [vmem:[%s2 + $0x18] sm:$0xff]
    %v45 = vld [vmem:[%s2 + $0x20] sm:$0xff]
    %v46 = vld [vmem:[%s2 + $0x28] sm:$0xff]
    %v47 = vld [vmem:[%s2 + $0x30] sm:$0xff]
    %v48 = vld [vmem:[%s2 + $0x38] sm:$0xff]
    %v49 = vld [vmem:[%s2 + $0x40] sm:$0xff]
    %v50 = vld [vmem:[%s2 + $0x48] sm:$0xff]
    %v51 = vld [vmem:[%s2 + $0x50] sm:$0xff]
    %v52 = vld [vmem:[%s2 + $0x58] sm:$0xff]
    %v53 = vld [vmem:[%s2 + $0x60] sm:$0xff]
    %v54 = vld [vmem:[%s2 + $0x68] sm:$0xff]
    %v55 = vld [vmem:[%s2 + $0x70] sm:$0xff]
    %v56 = vld [vmem:[%s2 + $0x78] sm:$0xff]
    %v57 = vld [vmem:[%s2 + $0x80] sm:$0xff]
    %v58 = vld [vmem:[%s2 + $0x88] sm:$0xff]
    %v59 = vld [vmem:[%s2 + $0x90] sm:$0xff]
    %v60 = vld [vmem:[%s2 + $0x98] sm:$0xff]
    %v61 = vld [vmem:[%s2 + $0xa0] sm:$0xff]
    %v62 = vld [vmem:[%s2 + $0xa8] sm:$0xff]
    %v63 = vld [vmem:[%s2 + $0xb0] sm:$0xff]
    %v64 = vld [vmem:[%s2 + $0xb8] sm:$0xff]
    %v65 = vld [vmem:[%s2 + $0xc0] sm:$0xff]
    %v66 = vld [vmem:[%s2 + $0xc8] sm:$0xff]
    %v67 = vld [vmem:[%s2 + $0xd0] sm:$0xff]
    %v68 = vld [vmem:[%s2 + $0xd8] sm:$0xff]
    %v69 = vld [vmem:[%s2 + $0xe0] sm:$0xff]
    %v70 = vld [vmem:[%s2 + $0xe8] sm:$0xff]
    %v71 = vld [vmem:[%s2 + $0xf0] sm:$0xff]
    %v72 = vld [vmem:[%s2 + $0xf8] sm:$0xff]
    %v73 = vld [vmem:[%s2 + $0x100] sm:$0xff]
    %v74 = vld [vmem:[%s2 + $0x108] sm:$0xff]
    %v75 = vld [vmem:[%s2 + $0x110] sm:$0xff]
    %v76 = vld [vmem:[%s2 + $0x118] sm:$0xff]
    %v77 = vld [vmem:[%s2 + $0x120] sm:$0xff]
    %v78 = vld [vmem:[%s2 + $0x128] sm:$0xff]
    %v79 = vld [vmem:[%s2 + $0x130] sm:$0xff]
    %v80 = vld [vmem:[%s2 + $0x138] sm:$0xff]
    %v81 = vld [vmem:[%s2 + $0x140] sm:$0xff]
    %v82 = vld [vmem:[%s2 + $0x148] sm:$0xff]
    %v83 = vld [vmem:[%s2 + $0x150] sm:$0xff]
    %v84 = vld [vmem:[%s2 + $0x158] sm:$0xff]
    %v85 = vld [vmem:[%s2 + $0x160] sm:$0xff]
    %v86 = vld [vmem:[%s2 + $0x168] sm:$0xff]
    %v87 = vld [vmem:[%s2 + $0x170] sm:$0xff]
    %v88 = vld [vmem:[%s2 + $0x178] sm:$0xff]
    %v89 = vld [vmem:[%s2 + $0x180] sm:$0xff]
    %v90 = vld [vmem:[%s2 + $0x188] sm:$0xff]
    %v91 = vld [vmem:[%s2 + $0x190] sm:$0xff]
    %v92 = vld [vmem:[%s2 + $0x198] sm:$0xff]
    %v93 = vld [vmem:[%s2 + $0x1a0] sm:$0xff]
    %v94 = vld [vmem:[%s2 + $0x1a8] sm:$0xff]
    %v95 = vld [vmem:[%s2 + $0x1b0] sm:$0xff]
    %v96 = vld [vmem:[%s2 + $0x1b8] sm:$0xff]
    %v97 = vld [vmem:[%s2 + $0x1c0] sm:$0xff]
    %v98 = vld [vmem:[%s2 + $0x1c8] sm:$0xff]
    %v99 = vld [vmem:[%s2 + $0x1d0] sm:$0xff]
    %v100 = vld [vmem:[%s2 + $0x1d8] sm:$0xff]
    %v101 = vld [vmem:[%s2 + $0x1e0] sm:$0xff]
    %v102 = vld [vmem:[%s2 + $0x1e8] sm:$0xff]
    %v103 = vld [vmem:[%s2 + $0x1f0] sm:$0xff]
    %v104 = vld [vmem:[%s2 + $0x1f8] sm:$0xff]
    %v105 = vld [vmem:[%s2 + $0x200] sm:$0xff]
    %v106 = vld [vmem:[%s2 + $0x208] sm:$0xff]
    %v107 = vld [vmem:[%s2 + $0x210] sm:$0xff]
    %v108 = vld [vmem:[%s2 + $0x218] sm:$0xff]
    %v109 = vld [vmem:[%s2 + $0x220] sm:$0xff]
    %v110 = vld [vmem:[%s2 + $0x228] sm:$0xff]
    %v111 = vld [vmem:[%s2 + $0x230] sm:$0xff]
    %v112 = vld [vmem:[%s2 + $0x238] sm:$0xff]
    %v113 = vld [vmem:[%s2 + $0x240] sm:$0xff]
    %v114 = vld [vmem:[%s2 + $0x248] sm:$0xff]
    %v115 = vld [vmem:[%s2 + $0x250] sm:$0xff]
    %v116 = vld [vmem:[%s2 + $0x258] sm:$0xff]
    %v117 = vld [vmem:[%s2 + $0x260] sm:$0xff]
    %v118 = vld [vmem:[%s2 + $0x268] sm:$0xff]
    %v119 = vld [vmem:[%s2 + $0x270] sm:$0xff]
    %v120 = vld [vmem:[%s2 + $0x278] sm:$0xff]
    %v121 = vld [vmem:[%s2 + $0x280] sm:$0xff]
    %v122 = vld [vmem:[%s2 + $0x288] sm:$0xff]
    %v123 = vld [vmem:[%s2 + $0x290] sm:$0xff]
    %v124 = vld [vmem:[%s2 + $0x298] sm:$0xff]
    %v125 = vld [vmem:[%s2 + $0x2a0] sm:$0xff]
    %v126 = vld [vmem:[%s2 + $0x2a8] sm:$0xff]
    %v127 = vld [vmem:[%s2 + $0x2b0] sm:$0xff]
    %v128 = vld [vmem:[%s2 + $0x2b8] sm:$0xff]
    %v129 = vld [vmem:[%s2 + $0x2c0] sm:$0xff]
    %v130 = vld [vmem:[%s2 + $0x2c8] sm:$0xff]
    %v131 = vld [vmem:[%s2 + $0x2d0] sm:$0xff]
    %v132 = vld [vmem:[%s2 + $0x2d8] sm:$0xff]
    %v133 = vld [vmem:[%s2 + $0x2e0] sm:$0xff]
    %v134 = vld [vmem:[%s2 + $0x2e8] sm:$0xff]
    %v135 = vld [vmem:[%s2 + $0x2f0] sm:$0xff]
    %v136 = vld [vmem:[%s2 + $0x2f8] sm:$0xff]
    %v137 = vld [vmem:[%s2 + $0x300] sm:$0xff]
    %v138 = vld [vmem:[%s2 + $0x308] sm:$0xff]
    %v139 = vld [vmem:[%s2 + $0x310] sm:$0xff]
    %v140 = vld [vmem:[%s2 + $0x318] sm:$0xff]
    %v141 = vld [vmem:[%s2 + $0x320] sm:$0xff]
    %v142 = vld [vmem:[%s2 + $0x328] sm:$0xff]
    %v143 = vld [vmem:[%s2 + $0x330] sm:$0xff]
    %v144 = vld [vmem:[%s2 + $0x338] sm:$0xff]
    %v145 = vld [vmem:[%s2 + $0x340] sm:$0xff]
    %v146 = vld [vmem:[%s2 + $0x348] sm:$0xff]
    %v147 = vld [vmem:[%s2 + $0x350] sm:$0xff]
    %v148 = vld [vmem:[%s2 + $0x358] sm:$0xff]
    %v149 = vld [vmem:[%s2 + $0x360] sm:$0xff]
    %v150 = vld [vmem:[%s2 + $0x368] sm:$0xff]
    %v151 = vld [vmem:[%s2 + $0x370] sm:$0xff]
    %v152 = vld [vmem:[%s2 + $0x378] sm:$0xff]
    %v153 = vld [vmem:[%s2 + $0x380] sm:$0xff]
    %v154 = vld [vmem:[%s2 + $0x388] sm:$0xff]
    %v155 = vld [vmem:[%s2 + $0x390] sm:$0xff]
    %v156 = vld [vmem:[%s2 + $0x398] sm:$0xff]
    %v157 = vld [vmem:[%s2 + $0x3a0] sm:$0xff]
    %v158 = vld [vmem:[%s2 + $0x3a8] sm:$0xff]
    %v159 = vld [vmem:[%s2 + $0x3b0] sm:$0xff]
    %v160 = vld [vmem:[%s2 + $0x3b8] sm:$0xff]
    %v161 = vld [vmem:[%s2 + $0x3c0] sm:$0xff]
    %v162 = vld [vmem:[%s2 + $0x3c8] sm:$0xff]
    %v163 = vld [vmem:[%s2 + $0x3d0] sm:$0xff]
    %v164 = vld [vmem:[%s2 + $0x3d8] sm:$0xff]
    %v165 = vld [vmem:[%s2 + $0x3e0] sm:$0xff]
    %v166 = vld [vmem:[%s2 + $0x3e8] sm:$0xff]
    %v167 = vld [vmem:[%s2 + $0x3f0] sm:$0xff]
    %v168 = vld [vmem:[%s2 + $0x3f8] sm:$0xff]
    %169 = vmatprep.subr.mxu0 %v102
    %170 = vmatpush1.msra.mxu0 %v101
    %171 = vmatprep.subr.mxu0 %v98
    %172 = vmatpush1.msra.mxu0 %v97
    %173 = vmatprep.subr.mxu0 %v94
    %174 = vmatpush1.msra.mxu0 %v93
    %175 = vmatprep.subr.mxu0 %v90
    %176 = vmatpush1.msra.mxu0 %v89
    %177 = vmatprep.subr.mxu0 %v86
    %178 = vmatpush1.msra.mxu0 %v85
    %179 = vmatprep.subr.mxu0 %v82
    %180 = vmatpush1.msra.mxu0 %v81
    %181 = vmatprep.subr.mxu0 %v78
    %182 = vmatpush1.msra.mxu0 %v77
    %183 = vmatprep.subr.mxu0 %v74
    %184 = vmatpush1.msra.mxu0 %v73
    %185 = vmatprep.subr.mxu0 %v70
    %186 = vmatpush1.msra.mxu0 %v69
    %187 = vmatprep.subr.mxu0 %v66
    %188 = vmatpush1.msra.mxu0 %v65
    %189 = vmatprep.subr.mxu0 %v62
    %190 = vmatpush1.msra.mxu0 %v61
    %191 = vmatprep.subr.mxu0 %v58
    %192 = vmatpush1.msra.mxu0 %v57
    %193 = vmatprep.subr.mxu0 %v54
    %194 = vmatpush1.msra.mxu0 %v53
    %195 = vmatprep.subr.mxu0 %v50
    %196 = vmatpush1.msra.mxu0 %v49
    %197 = vmatprep.subr.mxu0 %v46
    %198 = vmatpush1.msra.mxu0 %v45
    %199 = vmatprep.subr.mxu0 %v42
    %200 = vmatpush1.msra.mxu0 %v41
    %201 = vmatprep.subr.mxu0 %v166
    %202 = vmatpush2.msra.mxu0 %v165
    %203 = vmatprep.subr.mxu0 %v162
    %204 = vmatpush2.msra.mxu0 %v161
    %205 = vmatprep.subr.mxu0 %v158
    %206 = vmatpush2.msra.mxu0 %v157
    %207 = vmatprep.subr.mxu0 %v154
    %208 = vmatpush2.msra.mxu0 %v153
    %209 = vmatprep.subr.mxu0 %v150
    %210 = vmatpush2.msra.mxu0 %v149
    %211 = vmatprep.subr.mxu0 %v146
    %212 = vmatpush2.msra.mxu0 %v145
    %213 = vmatprep.subr.mxu0 %v142
    %214 = vmatpush2.msra.mxu0 %v141
    %215 = vmatprep.subr.mxu0 %v138
    %216 = vmatpush2.msra.mxu0 %v137
    %217 = vmatprep.subr.mxu0 %v134
    %218 = vmatpush2.msra.mxu0 %v133
    %219 = vmatprep.subr.mxu0 %v130
    %220 = vmatpush2.msra.mxu0 %v129
    %221 = vmatprep.subr.mxu0 %v126
    %222 = vmatpush2.msra.mxu0 %v125
    %223 = vmatprep.subr.mxu0 %v122
    %224 = vmatpush2.msra.mxu0 %v121
    %225 = vmatprep.subr.mxu0 %v118
    %226 = vmatpush2.msra.mxu0 %v117
    %227 = vmatprep.subr.mxu0 %v114
    %228 = vmatpush2.msra.mxu0 %v113
    %229 = vmatprep.subr.mxu0 %v110
    %230 = vmatpush2.msra.mxu0 %v109
    %231 = vmatprep.subr.mxu0 %v106
    %232 = vmatpush2.msra.mxu0 %v105
    %233 = vmatprep.mubr.f32.mxu0 %v37
    %234 = vmatmul.mubr.f32.gmra.mxu0 %v36
    %v235 = vpop.f32.mrf.mxu0
    %v236 = vadd.f32 0.0, %v235
    %v237 = vpop.f32.mrf.mxu0
    %v238 = vadd.f32 0.0, %v237
    %239 = vmatprep.mubr.f32.mxu0 %v39
    %240 = vmatmul.mubr.f32.gmra.mxu0 %v38
    %v241 = vpop.f32.mrf.mxu0
    %v242 = vadd.f32 0.0, %v241
    %v243 = vpop.f32.mrf.mxu0
    %v244 = vadd.f32 0.0, %v243
    %245 = vdwg.mxu0
    %246 = vmatprep.subr.mxu0 %v104
    %247 = vmatpush1.msra.mxu0 %v103
    %248 = vmatprep.subr.mxu0 %v100
    %249 = vmatpush1.msra.mxu0 %v99
    %250 = vmatprep.subr.mxu0 %v96
    %251 = vmatpush1.msra.mxu0 %v95
    %252 = vmatprep.subr.mxu0 %v92
    %253 = vmatpush1.msra.mxu0 %v91
    %254 = vmatprep.subr.mxu0 %v88
    %255 = vmatpush1.msra.mxu0 %v87
    %256 = vmatprep.subr.mxu0 %v84
    %257 = vmatpush1.msra.mxu0 %v83
    %258 = vmatprep.subr.mxu0 %v80
    %259 = vmatpush1.msra.mxu0 %v79
    %260 = vmatprep.subr.mxu0 %v76
    %261 = vmatpush1.msra.mxu0 %v75
    %262 = vmatprep.subr.mxu0 %v72
    %263 = vmatpush1.msra.mxu0 %v71
    %264 = vmatprep.subr.mxu0 %v68
    %265 = vmatpush1.msra.mxu0 %v67
    %266 = vmatprep.subr.mxu0 %v64
    %267 = vmatpush1.msra.mxu0 %v63
    %268 = vmatprep.subr.mxu0 %v60
    %269 = vmatpush1.msra.mxu0 %v59
    %270 = vmatprep.subr.mxu0 %v56
    %271 = vmatpush1.msra.mxu0 %v55
    %272 = vmatprep.subr.mxu0 %v52
    %273 = vmatpush1.msra.mxu0 %v51
    %274 = vmatprep.subr.mxu0 %v48
    %275 = vmatpush1.msra.mxu0 %v47
    %276 = vmatprep.subr.mxu0 %v44
    %277 = vmatpush1.msra.mxu0 %v43
    %278 = vmatprep.subr.mxu0 %v168
    %279 = vmatpush2.msra.mxu0 %v167
    %280 = vmatprep.subr.mxu0 %v164
    %281 = vmatpush2.msra.mxu0 %v163
    %282 = vmatprep.subr.mxu0 %v160
    %283 = vmatpush2.msra.mxu0 %v159
    %284 = vmatprep.subr.mxu0 %v156
    %285 = vmatpush2.msra.mxu0 %v155
    %286 = vmatprep.subr.mxu0 %v152
    %287 = vmatpush2.msra.mxu0 %v151
    %288 = vmatprep.subr.mxu0 %v148
    %289 = vmatpush2.msra.mxu0 %v147
    %290 = vmatprep.subr.mxu0 %v144
    %291 = vmatpush2.msra.mxu0 %v143
    %292 = vmatprep.subr.mxu0 %v140
    %293 = vmatpush2.msra.mxu0 %v139
    %294 = vmatprep.subr.mxu0 %v136
    %295 = vmatpush2.msra.mxu0 %v135
    %296 = vmatprep.subr.mxu0 %v132
    %297 = vmatpush2.msra.mxu0 %v131
    %298 = vmatprep.subr.mxu0 %v128
    %299 = vmatpush2.msra.mxu0 %v127
    %300 = vmatprep.subr.mxu0 %v124
    %301 = vmatpush2.msra.mxu0 %v123
    %302 = vmatprep.subr.mxu0 %v120
    %303 = vmatpush2.msra.mxu0 %v119
    %304 = vmatprep.subr.mxu0 %v116
    %305 = vmatpush2.msra.mxu0 %v115
    %306 = vmatprep.subr.mxu0 %v112
    %307 = vmatpush2.msra.mxu0 %v111
    %308 = vmatprep.subr.mxu0 %v108
    %309 = vmatpush2.msra.mxu0 %v107
    %310 = vmatprep.mubr.f32.mxu0 %v37
    %311 = vmatmul.mubr.f32.gmra.mxu0 %v36
    %v312 = vpop.f32.mrf.mxu0
    %v313 = vadd.f32 0.0, %v312
    %v314 = vpop.f32.mrf.mxu0
    %v315 = vadd.f32 0.0, %v314
    %316 = vmatprep.mubr.f32.mxu0 %v39
    %317 = vmatmul.mubr.f32.gmra.mxu0 %v38
    %v318 = vpop.f32.mrf.mxu0
    %v319 = vadd.f32 0.0, %v318
    %v320 = vpop.f32.mrf.mxu0
    %v321 = vadd.f32 0.0, %v320
    %322 = vdwg.mxu0
    %329 = vrot.lane.b32.xlu0 %v238, 32
    %v330 = vpop.permute.xlu0 %329
    %331 = vrot.lane.b32.xlu0 %v313, 32
    %v332 = vpop.permute.xlu0 %331
    %333 = vrot.lane.b32.xlu0 %v315, 32
    %v334 = vpop.permute.xlu0 %333
    %335 = vrot.lane.b32.xlu0 %v244, 32
    %v336 = vpop.permute.xlu0 %335
    %337 = vrot.lane.b32.xlu0 %v319, 32
    %v338 = vpop.permute.xlu0 %337
    %339 = vrot.lane.b32.xlu0 %v321, 32
    %v340 = vpop.permute.xlu0 %339
    %vm341 = vcmask 261120
    %v342 = vsel %vm341, %v330, %v332
    %v343 = vsel %vm341, %v332, %v334
    %v344 = vsel %vm341, %v336, %v338
    %v345 = vsel %vm341, %v338, %v340
    %v350 = vmax.f32 %v236, %v342
    %v351 = vmax.f32 %v238, %v343
    %v352 = vmax.f32 %v242, %v344
    %v353 = vmax.f32 %v244, %v345
    %v355 = vlaneseq
    %v356 = vshrl.u32 %v355, 7
    %v357 = vsub.s32 0, %v356
    %v358 = vrot.slane %v40, %v357
    %v359 = vlaneseq
    %v360 = vshrl.u32 %v359, 7
    %v361 = vsub.s32 1, %v360
    %v362 = vrot.slane %v40, %v361
    %363 = vrot.lane.b32.xlu0 %v358, 96
    %v364 = vpop.permute.xlu0 %363
    %365 = vrot.lane.b32.xlu0 %v362, 96
    %v366 = vpop.permute.xlu0 %365
    %vm367 = vcmask 785408
    %v368 = vsel %vm367, %v364, %v366
    %v371 = vadd.f32 %v350, %v368
    %v372 = vadd.f32 %v351, %v366
    %v373 = vadd.f32 %v352, %v368
    %v374 = vadd.f32 %v353, %v366
    %v375 = vld [vmem:[%s3] sm:$0xff]
    %v376 = vld [vmem:[%s3 + $0x8] sm:$0xff]
    %v377 = vld [vmem:[%s3 + $0x10] sm:$0xff]
    %v378 = vld [vmem:[%s3 + $0x18] sm:$0xff]
    %v379 = vld [vmem:[%s3 + $0x20] sm:$0xff]
    %v380 = vld [vmem:[%s3 + $0x28] sm:$0xff]
    %v381 = vld [vmem:[%s3 + $0x30] sm:$0xff]
    %v382 = vld [vmem:[%s3 + $0x38] sm:$0xff]
    %v383 = vld [vmem:[%s3 + $0x40] sm:$0xff]
    %v384 = vld [vmem:[%s3 + $0x48] sm:$0xff]
    %v385 = vld [vmem:[%s3 + $0x50] sm:$0xff]
    %v386 = vld [vmem:[%s3 + $0x58] sm:$0xff]
    %v387 = vld [vmem:[%s3 + $0x60] sm:$0xff]
    %v388 = vld [vmem:[%s3 + $0x68] sm:$0xff]
    %v389 = vld [vmem:[%s3 + $0x70] sm:$0xff]
    %v390 = vld [vmem:[%s3 + $0x78] sm:$0xff]
    %v391 = vld [vmem:[%s3 + $0x80] sm:$0xff]
    %v392 = vld [vmem:[%s3 + $0x88] sm:$0xff]
    %v393 = vld [vmem:[%s3 + $0x90] sm:$0xff]
    %v394 = vld [vmem:[%s3 + $0x98] sm:$0xff]
    %v395 = vld [vmem:[%s3 + $0xa0] sm:$0xff]
    %v396 = vld [vmem:[%s3 + $0xa8] sm:$0xff]
    %v397 = vld [vmem:[%s3 + $0xb0] sm:$0xff]
    %v398 = vld [vmem:[%s3 + $0xb8] sm:$0xff]
    %v399 = vld [vmem:[%s3 + $0xc0] sm:$0xff]
    %v400 = vld [vmem:[%s3 + $0xc8] sm:$0xff]
    %v401 = vld [vmem:[%s3 + $0xd0] sm:$0xff]
    %v402 = vld [vmem:[%s3 + $0xd8] sm:$0xff]
    %v403 = vld [vmem:[%s3 + $0xe0] sm:$0xff]
    %v404 = vld [vmem:[%s3 + $0xe8] sm:$0xff]
    %v405 = vld [vmem:[%s3 + $0xf0] sm:$0xff]
    %v406 = vld [vmem:[%s3 + $0xf8] sm:$0xff]
    %v407 = vld [vmem:[%s3 + $0x100] sm:$0xff]
    %v408 = vld [vmem:[%s3 + $0x108] sm:$0xff]
    %v409 = vld [vmem:[%s3 + $0x110] sm:$0xff]
    %v410 = vld [vmem:[%s3 + $0x118] sm:$0xff]
    %v411 = vld [vmem:[%s3 + $0x120] sm:$0xff]
    %v412 = vld [vmem:[%s3 + $0x128] sm:$0xff]
    %v413 = vld [vmem:[%s3 + $0x130] sm:$0xff]
    %v414 = vld [vmem:[%s3 + $0x138] sm:$0xff]
    %v415 = vld [vmem:[%s3 + $0x140] sm:$0xff]
    %v416 = vld [vmem:[%s3 + $0x148] sm:$0xff]
    %v417 = vld [vmem:[%s3 + $0x150] sm:$0xff]
    %v418 = vld [vmem:[%s3 + $0x158] sm:$0xff]
    %v419 = vld [vmem:[%s3 + $0x160] sm:$0xff]
    %v420 = vld [vmem:[%s3 + $0x168] sm:$0xff]
    %v421 = vld [vmem:[%s3 + $0x170] sm:$0xff]
    %v422 = vld [vmem:[%s3 + $0x178] sm:$0xff]
    %v423 = vld [vmem:[%s3 + $0x180] sm:$0xff]
    %v424 = vld [vmem:[%s3 + $0x188] sm:$0xff]
    %v425 = vld [vmem:[%s3 + $0x190] sm:$0xff]
    %v426 = vld [vmem:[%s3 + $0x198] sm:$0xff]
    %v427 = vld [vmem:[%s3 + $0x1a0] sm:$0xff]
    %v428 = vld [vmem:[%s3 + $0x1a8] sm:$0xff]
    %v429 = vld [vmem:[%s3 + $0x1b0] sm:$0xff]
    %v430 = vld [vmem:[%s3 + $0x1b8] sm:$0xff]
    %v432 = vsel %vm367, %v372, 0
    %v435 = vsel %vm367, %v374, 0
    %437 = vmatprep.subr.mxu0 %v406
    %438 = vmatpush1.msra.mxu0 %v405
    %439 = vmatprep.subr.mxu0 %v404
    %440 = vmatpush1.msra.mxu0 %v403
    %441 = vmatprep.subr.mxu0 %v402
    %442 = vmatpush1.msra.mxu0 %v401
    %443 = vmatprep.subr.mxu0 %v400
    %444 = vmatpush1.msra.mxu0 %v399
    %445 = vmatprep.subr.mxu0 %v398
    %446 = vmatpush1.msra.mxu0 %v397
    %447 = vmatprep.subr.mxu0 %v396
    %448 = vmatpush1.msra.mxu0 %v395
    %449 = vmatprep.subr.mxu0 %v394
    %450 = vmatpush1.msra.mxu0 %v393
    %451 = vmatprep.subr.mxu0 %v392
    %452 = vmatpush1.msra.mxu0 %v391
    %453 = vmatprep.subr.mxu0 %v390
    %454 = vmatpush1.msra.mxu0 %v389
    %455 = vmatprep.subr.mxu0 %v388
    %456 = vmatpush1.msra.mxu0 %v387
    %457 = vmatprep.subr.mxu0 %v386
    %458 = vmatpush1.msra.mxu0 %v385
    %459 = vmatprep.subr.mxu0 %v384
    %460 = vmatpush1.msra.mxu0 %v383
    %461 = vmatprep.subr.mxu0 %v382
    %462 = vmatpush1.msra.mxu0 %v381
    %463 = vmatprep.subr.mxu0 %v380
    %464 = vmatpush1.msra.mxu0 %v379
    %465 = vmatprep.subr.mxu0 %v378
    %466 = vmatpush1.msra.mxu0 %v377
    %467 = vmatprep.subr.mxu0 %v376
    %468 = vmatpush1.msra.mxu0 %v375
    %469 = vmatprep.subr.mxu0 0.0
    %470 = vmatpush2.msra.mxu0 0.0
    %471 = vmatprep.subr.mxu0 0.0
    %472 = vmatpush2.msra.mxu0 0.0
    %473 = vmatprep.subr.mxu0 0.0
    %474 = vmatpush2.msra.mxu0 0.0
    %475 = vmatprep.subr.mxu0 0.0
    %476 = vmatpush2.msra.mxu0 0.0
    %477 = vmatprep.subr.mxu0 %v430
    %478 = vmatpush2.msra.mxu0 %v429
    %479 = vmatprep.subr.mxu0 %v428
    %480 = vmatpush2.msra.mxu0 %v427
    %481 = vmatprep.subr.mxu0 %v426
    %482 = vmatpush2.msra.mxu0 %v425
    %483 = vmatprep.subr.mxu0 %v424
    %484 = vmatpush2.msra.mxu0 %v423
    %485 = vmatprep.subr.mxu0 %v422
    %486 = vmatpush2.msra.mxu0 %v421
    %487 = vmatprep.subr.mxu0 %v420
    %488 = vmatpush2.msra.mxu0 %v419
    %489 = vmatprep.subr.mxu0 %v418
    %490 = vmatpush2.msra.mxu0 %v417
    %491 = vmatprep.subr.mxu0 %v416
    %492 = vmatpush2.msra.mxu0 %v415
    %493 = vmatprep.subr.mxu0 %v414
    %494 = vmatpush2.msra.mxu0 %v413
    %495 = vmatprep.subr.mxu0 %v412
    %496 = vmatpush2.msra.mxu0 %v411
    %497 = vmatprep.subr.mxu0 %v410
    %498 = vmatpush2.msra.mxu0 %v409
    %499 = vmatprep.subr.mxu0 %v408
    %500 = vmatpush2.msra.mxu0 %v407
    %501 = vmatprep.mubr.f32.mxu0 %v432
    %502 = vmatmul.mubr.f32.gmra.mxu0 %v371
    %v503 = vpop.f32.mrf.mxu0
    %v504 = vadd.f32 0.0, %v503
    %v505 = vpop.f32.mrf.mxu0
    %v506 = vadd.f32 0.0, %v505
    %507 = vmatprep.mubr.f32.mxu0 %v435
    %508 = vmatmul.mubr.f32.gmra.mxu0 %v373
    %v509 = vpop.f32.mrf.mxu0
    %v510 = vadd.f32 0.0, %v509
    %v511 = vpop.f32.mrf.mxu0
    %v512 = vadd.f32 0.0, %v511
    %513 = vdwg.mxu0
    %518 = vrot.lane.b32.xlu0 %v504, 16
    %v519 = vpop.permute.xlu0 %518
    %520 = vrot.lane.b32.xlu0 %v506, 16
    %v521 = vpop.permute.xlu0 %520
    %522 = vrot.lane.b32.xlu0 %v510, 16
    %v523 = vpop.permute.xlu0 %522
    %524 = vrot.lane.b32.xlu0 %v512, 16
    %v525 = vpop.permute.xlu0 %524
    %vm526 = vcmask 130048
    %v527 = vsel %vm526, %v519, %v521
    %v528 = vsel %vm526, %v523, %v525
    %v531 = vmax.f32 %v504, %v527
    %v532 = vmax.f32 %v510, %v528
    %s533 = sld [smem:[#allocation2]]
    %s534 = sld [smem:[#allocation2 + $0x1]]
    %535 = vrot.lane.b32.xlu0 %v506, 123
    %v536 = vpop.permute.xlu0 %535
    %537 = vrot.lane.b32.xlu0 %v512, 123
    %v538 = vpop.permute.xlu0 %537
    %v541 = vmax.f32 %v506, %v536
    %v542 = vmax.f32 %v512, %v538
    %v543 = vstv %s533
    %v544 = vadd.f32 %v541, %v543
    %v545 = vadd.f32 %v542, %v543
    %v546 = vld [vmem:[%s4] sm:$0xff]
    %v547 = vld [vmem:[%s4 + $0x10] sm:$0xff]
    %v548 = vld [vmem:[%s4 + $0x20] sm:$0xff]
    %v549 = vld [vmem:[%s4 + $0x30] sm:$0xff]
    %v550 = vld [vmem:[%s4 + $0x40] sm:$0xff]
    %v551 = vld [vmem:[%s4 + $0x50] sm:$0xff]
    %v552 = vld [vmem:[%s4 + $0x60] sm:$0xff]
    %v553 = vld [vmem:[%s4 + $0x70] sm:$0xff]
    %v554 = vld [vmem:[%s4 + $0x80] sm:$0xff]
    %v555 = vld [vmem:[%s4 + $0x90] sm:$0xff]
    %v556 = vld [vmem:[%s4 + $0xa0] sm:$0xff]
    %v557 = vld [vmem:[%s4 + $0xb0] sm:$0xff]
    %v558 = vld [vmem:[%s4 + $0xc0] sm:$0xff]
    %v559 = vld [vmem:[%s4 + $0xd0] sm:$0xff]
    %vm560 = vcmask 916480
    %v562 = vsel %vm560, %v531, 0
    %v565 = vsel %vm560, %v532, 0
    %567 = vmatprep.subr.mxu0 0.0
    %568 = vmatpush1.msra.mxu0 0.0
    %569 = vmatprep.subr.mxu0 0.0
    %570 = vmatpush1.msra.mxu0 0.0
    %571 = vmatprep.subr.mxu0 0.0
    %572 = vmatpush1.msra.mxu0 %v559
    %573 = vmatprep.subr.mxu0 0.0
    %574 = vmatpush1.msra.mxu0 %v558
    %575 = vmatprep.subr.mxu0 0.0
    %576 = vmatpush1.msra.mxu0 %v557
    %577 = vmatprep.subr.mxu0 0.0
    %578 = vmatpush1.msra.mxu0 %v556
    %579 = vmatprep.subr.mxu0 0.0
    %580 = vmatpush1.msra.mxu0 %v555
    %581 = vmatprep.subr.mxu0 0.0
    %582 = vmatpush1.msra.mxu0 %v554
    %583 = vmatprep.subr.mxu0 0.0
    %584 = vmatpush1.msra.mxu0 %v553
    %585 = vmatprep.subr.mxu0 0.0
    %586 = vmatpush1.msra.mxu0 %v552
    %587 = vmatprep.subr.mxu0 0.0
    %588 = vmatpush1.msra.mxu0 %v551
    %589 = vmatprep.subr.mxu0 0.0
    %590 = vmatpush1.msra.mxu0 %v550
    %591 = vmatprep.subr.mxu0 0.0
    %592 = vmatpush1.msra.mxu0 %v549
    %593 = vmatprep.subr.mxu0 0.0
    %594 = vmatpush1.msra.mxu0 %v548
    %595 = vmatprep.subr.mxu0 0.0
    %596 = vmatpush1.msra.mxu0 %v547
    %597 = vmatprep.subr.mxu0 0.0
    %598 = vmatpush1.msra.mxu0 %v546
    %599 = vmatprep.subr.mxu0 0.0
    %600 = vmatpush2.msra.mxu0 0.0
    %601 = vmatprep.subr.mxu0 0.0
    %602 = vmatpush2.msra.mxu0 0.0
    %603 = vmatprep.subr.mxu0 0.0
    %604 = vmatpush2.msra.mxu0 0.0
    %605 = vmatprep.subr.mxu0 0.0
    %606 = vmatpush2.msra.mxu0 0.0
    %607 = vmatprep.subr.mxu0 0.0
    %608 = vmatpush2.msra.mxu0 0.0
    %609 = vmatprep.subr.mxu0 0.0
    %610 = vmatpush2.msra.mxu0 0.0
    %611 = vmatprep.subr.mxu0 0.0
    %612 = vmatpush2.msra.mxu0 0.0
    %613 = vmatprep.subr.mxu0 0.0
    %614 = vmatpush2.msra.mxu0 0.0
    %615 = vmatprep.subr.mxu0 0.0
    %616 = vmatpush2.msra.mxu0 0.0
    %617 = vmatprep.subr.mxu0 0.0
    %618 = vmatpush2.msra.mxu0 0.0
    %619 = vmatprep.subr.mxu0 0.0
    %620 = vmatpush2.msra.mxu0 0.0
    %621 = vmatprep.subr.mxu0 0.0
    %622 = vmatpush2.msra.mxu0 0.0
    %623 = vmatprep.subr.mxu0 0.0
    %624 = vmatpush2.msra.mxu0 0.0
    %625 = vmatprep.subr.mxu0 0.0
    %626 = vmatpush2.msra.mxu0 0.0
    %627 = vmatprep.subr.mxu0 0.0
    %628 = vmatpush2.msra.mxu0 0.0
    %629 = vmatprep.subr.mxu0 0.0
    %630 = vmatpush2.msra.mxu0 0.0
    %631 = vmatprep.mubr.f32.mxu0 0.0
    %632 = vmatmul.mubr.f32.gmra.mxu0 %v562
    %v633 = vpop.f32.mrf.mxu0
    %v634 = vadd.f32 0.0, %v633
    %v635 = vpop.f32.mrf.mxu0
    %636 = vmatprep.mubr.f32.mxu0 0.0
    %637 = vmatmul.mubr.f32.gmra.mxu0 %v565
    %v638 = vpop.f32.mrf.mxu0
    %v639 = vadd.f32 0.0, %v638
    %v640 = vpop.f32.mrf.mxu0
    %641 = vdwg.mxu0
    %644 = vrot.lane.b32.xlu0 %v634, 127
    %v645 = vpop.permute.xlu0 %644
    %646 = vrot.lane.b32.xlu0 %v639, 127
    %v647 = vpop.permute.xlu0 %646
    %v650 = vmax.f32 %v634, %v645
    %v651 = vmax.f32 %v639, %v647
    %v652 = vadd.f32 %v650, %v543
    %v653 = vadd.f32 %v651, %v543
    %654 = vrot.lane.b32.xlu0 %v634, 125
    %v655 = vpop.permute.xlu0 %654
    %656 = vrot.lane.b32.xlu0 %v639, 125
    %v657 = vpop.permute.xlu0 %656
    %v660 = vmax.f32 %v634, %v655
    %v661 = vmax.f32 %v639, %v657
    %v662 = vstv %s534
    %v663 = vadd.f32 %v660, %v662
    %v664 = vadd.f32 %v661, %v662
    %667 = vrot.lane.b32.xlu0 %v544, 32
    %v668 = vpop.permute.xlu0 %667
    %669 = vrot.lane.b32.xlu0 %v545, 32
    %v670 = vpop.permute.xlu0 %669
    %vm671 = vcmask 39936
    %v672 = vsel %vm671, %v668, 0
    %v674 = vsel %vm671, %v670, 0
    %676 = vmatprep.subr.mxu0 0.0
    %677 = vmatpush1.xpose.msra.mxu0 0.0
    %678 = vmatprep.subr.mxu0 0.0
    %679 = vmatpush1.xpose.msra.mxu0 0.0
    %680 = vmatprep.subr.mxu0 0.0
    %681 = vmatpush1.xpose.msra.mxu0 0.0
    %682 = vmatprep.subr.mxu0 0.0
    %683 = vmatpush1.xpose.msra.mxu0 0.0
    %684 = vmatprep.subr.mxu0 0.0
    %685 = vmatpush1.xpose.msra.mxu0 0.0
    %686 = vmatprep.subr.mxu0 0.0
    %687 = vmatpush1.xpose.msra.mxu0 0.0
    %688 = vmatprep.subr.mxu0 0.0
    %689 = vmatpush1.xpose.msra.mxu0 0.0
    %690 = vmatprep.subr.mxu0 0.0
    %691 = vmatpush1.xpose.msra.mxu0 0.0
    %692 = vmatprep.subr.mxu0 0.0
    %693 = vmatpush1.xpose.msra.mxu0 0.0
    %694 = vmatprep.subr.mxu0 0.0
    %695 = vmatpush1.xpose.msra.mxu0 0.0
    %696 = vmatprep.subr.mxu0 0.0
    %697 = vmatpush1.xpose.msra.mxu0 0.0
    %698 = vmatprep.subr.mxu0 0.0
    %699 = vmatpush1.xpose.msra.mxu0 0.0
    %700 = vmatprep.subr.mxu0 0.0
    %701 = vmatpush1.xpose.msra.mxu0 0.0
    %702 = vmatprep.subr.mxu0 0.0
    %703 = vmatpush1.xpose.msra.mxu0 0.0
    %704 = vmatprep.subr.mxu0 0.0
    %705 = vmatpush1.xpose.msra.mxu0 %v674
    %706 = vmatprep.subr.mxu0 0.0
    %707 = vmatpush1.xpose.msra.mxu0 %v672
    %708 = vmatprep.subr.mxu0 0.0
    %709 = vmatpush2.xpose.msra.mxu0 0.0
    %710 = vmatprep.subr.mxu0 0.0
    %711 = vmatpush2.xpose.msra.mxu0 0.0
    %712 = vmatprep.subr.mxu0 0.0
    %713 = vmatpush2.xpose.msra.mxu0 0.0
    %714 = vmatprep.subr.mxu0 0.0
    %715 = vmatpush2.xpose.msra.mxu0 0.0
    %716 = vmatprep.subr.mxu0 0.0
    %717 = vmatpush2.xpose.msra.mxu0 0.0
    %718 = vmatprep.subr.mxu0 0.0
    %719 = vmatpush2.xpose.msra.mxu0 0.0
    %720 = vmatprep.subr.mxu0 0.0
    %721 = vmatpush2.xpose.msra.mxu0 0.0
    %722 = vmatprep.subr.mxu0 0.0
    %723 = vmatpush2.xpose.msra.mxu0 0.0
    %724 = vmatprep.subr.mxu0 0.0
    %725 = vmatpush2.xpose.msra.mxu0 0.0
    %726 = vmatprep.subr.mxu0 0.0
    %727 = vmatpush2.xpose.msra.mxu0 0.0
    %728 = vmatprep.subr.mxu0 0.0
    %729 = vmatpush2.xpose.msra.mxu0 0.0
    %730 = vmatprep.subr.mxu0 0.0
    %731 = vmatpush2.xpose.msra.mxu0 0.0
    %732 = vmatprep.subr.mxu0 0.0
    %733 = vmatpush2.xpose.msra.mxu0 0.0
    %734 = vmatprep.subr.mxu0 0.0
    %735 = vmatpush2.xpose.msra.mxu0 0.0
    %736 = vmatprep.subr.mxu0 0.0
    %737 = vmatpush2.xpose.msra.mxu0 0.0
    %738 = vmatprep.subr.mxu0 0.0
    %739 = vmatpush2.xpose.msra.mxu0 0.0
    %740 = vmatprep.mubr.f32.mxu0 0.0
    %741 = vmatmul.mubr.f32.gmra.mxu0 %v672
    %v742 = vpop.f32.mrf.mxu0
    %v743 = vadd.f32 0.0, %v742
    %v744 = vpop.f32.mrf.mxu0
    %745 = vmatprep.mubr.f32.mxu0 0.0
    %746 = vmatmul.mubr.f32.gmra.mxu0 %v674
    %v747 = vpop.f32.mrf.mxu0
    %v748 = vadd.f32 0.0, %v747
    %v749 = vpop.f32.mrf.mxu0
    %750 = vdwg.mxu0
    %v751 = vmul.f32 %v544, %v544
    %v752 = vmul.f32 %v545, %v545
    %755 = vrot.lane.b32.xlu0 %v751, 32
    %v756 = vpop.permute.xlu0 %755
    %757 = vrot.lane.b32.xlu0 %v752, 32
    %v758 = vpop.permute.xlu0 %757
    %v761 = vsel %vm671, %v756, 0.0
    %762 = vadd.xlane.f32.xlu0 %v761
    %v763 = vpop.xlane.xlu0 %762
    %vm764 = vcmask 37888
    %v765 = vsel %vm764, %v758, 0.0
    %766 = vadd.xlane.f32.xlu0 %v765
    %v767 = vpop.xlane.xlu0 %766
    %v768 = vrsqrt.pop %v763
    %v769 = vmul.f32 %v763, %v768
    %vm770 = vcmp.eq.f32.partialorder %v763, inf
    %v771 = vsel %vm770, %v763, %v769
    %vm772 = vcmp.eq.f32.partialorder %v763, 0.0
    %v773 = vand.u32 %v763, 2147483648
    %v774 = vsel %vm772, %v773, %v771
    %v775 = vrsqrt.pop %v767
    %v776 = vmul.f32 %v767, %v775
    %vm777 = vcmp.eq.f32.partialorder %v767, inf
    %v778 = vsel %vm777, %v767, %v776
    %vm779 = vcmp.eq.f32.partialorder %v767, 0.0
    %v780 = vand.u32 %v767, 2147483648
    %v781 = vsel %vm779, %v780, %v778
    %vm782 = vcmask 7168
    %v784 = vsel %vm782, %v774, 0
    %v787 = vsel %vm782, %v781, 0
    %789 = vmatprep.subr.mxu0 0.0
    %790 = vmatpush1.xpose.msra.mxu0 0.0
    %791 = vmatprep.subr.mxu0 0.0
    %792 = vmatpush1.xpose.msra.mxu0 0.0
    %793 = vmatprep.subr.mxu0 0.0
    %794 = vmatpush1.xpose.msra.mxu0 0.0
    %795 = vmatprep.subr.mxu0 0.0
    %796 = vmatpush1.xpose.msra.mxu0 0.0
    %797 = vmatprep.subr.mxu0 0.0
    %798 = vmatpush1.xpose.msra.mxu0 0.0
    %799 = vmatprep.subr.mxu0 0.0
    %800 = vmatpush1.xpose.msra.mxu0 0.0
    %801 = vmatprep.subr.mxu0 0.0
    %802 = vmatpush1.xpose.msra.mxu0 0.0
    %803 = vmatprep.subr.mxu0 0.0
    %804 = vmatpush1.xpose.msra.mxu0 0.0
    %805 = vmatprep.subr.mxu0 0.0
    %806 = vmatpush1.xpose.msra.mxu0 0.0
    %807 = vmatprep.subr.mxu0 0.0
    %808 = vmatpush1.xpose.msra.mxu0 0.0
    %809 = vmatprep.subr.mxu0 0.0
    %810 = vmatpush1.xpose.msra.mxu0 0.0
    %811 = vmatprep.subr.mxu0 0.0
    %812 = vmatpush1.xpose.msra.mxu0 0.0
    %813 = vmatprep.subr.mxu0 0.0
    %814 = vmatpush1.xpose.msra.mxu0 0.0
    %815 = vmatprep.subr.mxu0 0.0
    %816 = vmatpush1.xpose.msra.mxu0 0.0
    %817 = vmatprep.subr.mxu0 0.0
    %818 = vmatpush1.xpose.msra.mxu0 %v787
    %819 = vmatprep.subr.mxu0 0.0
    %820 = vmatpush1.xpose.msra.mxu0 %v784
    %821 = vmatprep.subr.mxu0 0.0
    %822 = vmatpush2.xpose.msra.mxu0 0.0
    %823 = vmatprep.subr.mxu0 0.0
    %824 = vmatpush2.xpose.msra.mxu0 0.0
    %825 = vmatprep.subr.mxu0 0.0
    %826 = vmatpush2.xpose.msra.mxu0 0.0
    %827 = vmatprep.subr.mxu0 0.0
    %828 = vmatpush2.xpose.msra.mxu0 0.0
    %829 = vmatprep.subr.mxu0 0.0
    %830 = vmatpush2.xpose.msra.mxu0 0.0
    %831 = vmatprep.subr.mxu0 0.0
    %832 = vmatpush2.xpose.msra.mxu0 0.0
    %833 = vmatprep.subr.mxu0 0.0
    %834 = vmatpush2.xpose.msra.mxu0 0.0
    %835 = vmatprep.subr.mxu0 0.0
    %836 = vmatpush2.xpose.msra.mxu0 0.0
    %837 = vmatprep.subr.mxu0 0.0
    %838 = vmatpush2.xpose.msra.mxu0 0.0
    %839 = vmatprep.subr.mxu0 0.0
    %840 = vmatpush2.xpose.msra.mxu0 0.0
    %841 = vmatprep.subr.mxu0 0.0
    %842 = vmatpush2.xpose.msra.mxu0 0.0
    %843 = vmatprep.subr.mxu0 0.0
    %844 = vmatpush2.xpose.msra.mxu0 0.0
    %845 = vmatprep.subr.mxu0 0.0
    %846 = vmatpush2.xpose.msra.mxu0 0.0
    %847 = vmatprep.subr.mxu0 0.0
    %848 = vmatpush2.xpose.msra.mxu0 0.0
    %849 = vmatprep.subr.mxu0 0.0
    %850 = vmatpush2.xpose.msra.mxu0 0.0
    %851 = vmatprep.subr.mxu0 0.0
    %852 = vmatpush2.xpose.msra.mxu0 0.0
    %853 = vmatprep.mubr.f32.mxu0 0.0
    %854 = vmatmul.mubr.f32.gmra.mxu0 %v784
    %v855 = vpop.f32.mrf.mxu0
    %v856 = vadd.f32 0.0, %v855
    %v857 = vpop.f32.mrf.mxu0
    %858 = vmatprep.mubr.f32.mxu0 0.0
    %859 = vmatmul.mubr.f32.gmra.mxu0 %v787
    %v860 = vpop.f32.mrf.mxu0
    %v861 = vadd.f32 0.0, %v860
    %v862 = vpop.f32.mrf.mxu0
    %863 = vdwg.mxu0
    %v864 = vmax.f32 %v856, 1e-08
    %v865 = vmax.f32 %v861, 1e-08
    %v866 = vrcp.pop %v864
    %v867 = vrcp.pop %v865
    %v868 = vmul.f32 %v743, %v866
    %v869 = vmul.f32 %v748, %v867
    %872 = vrot.lane.b32.xlu0 %v663, 126
    %v873 = vpop.permute.xlu0 %872
    %874 = vrot.lane.b32.xlu0 %v664, 126
    %v875 = vpop.permute.xlu0 %874
    %vm876 = vcmask 23552
    %v877 = vsel %vm876, %v873, 0
    %v879 = vsel %vm876, %v875, 0
    %881 = vmatprep.subr.mxu0 0.0
    %882 = vmatpush1.xpose.msra.mxu0 0.0
    %883 = vmatprep.subr.mxu0 0.0
    %884 = vmatpush1.xpose.msra.mxu0 0.0
    %885 = vmatprep.subr.mxu0 0.0
    %886 = vmatpush1.xpose.msra.mxu0 0.0
    %887 = vmatprep.subr.mxu0 0.0
    %888 = vmatpush1.xpose.msra.mxu0 0.0
    %889 = vmatprep.subr.mxu0 0.0
    %890 = vmatpush1.xpose.msra.mxu0 0.0
    %891 = vmatprep.subr.mxu0 0.0
    %892 = vmatpush1.xpose.msra.mxu0 0.0
    %893 = vmatprep.subr.mxu0 0.0
    %894 = vmatpush1.xpose.msra.mxu0 0.0
    %895 = vmatprep.subr.mxu0 0.0
    %896 = vmatpush1.xpose.msra.mxu0 0.0
    %897 = vmatprep.subr.mxu0 0.0
    %898 = vmatpush1.xpose.msra.mxu0 0.0
    %899 = vmatprep.subr.mxu0 0.0
    %900 = vmatpush1.xpose.msra.mxu0 0.0
    %901 = vmatprep.subr.mxu0 0.0
    %902 = vmatpush1.xpose.msra.mxu0 0.0
    %903 = vmatprep.subr.mxu0 0.0
    %904 = vmatpush1.xpose.msra.mxu0 0.0
    %905 = vmatprep.subr.mxu0 0.0
    %906 = vmatpush1.xpose.msra.mxu0 0.0
    %907 = vmatprep.subr.mxu0 0.0
    %908 = vmatpush1.xpose.msra.mxu0 0.0
    %909 = vmatprep.subr.mxu0 0.0
    %910 = vmatpush1.xpose.msra.mxu0 %v879
    %911 = vmatprep.subr.mxu0 0.0
    %912 = vmatpush1.xpose.msra.mxu0 %v877
    %913 = vmatprep.subr.mxu0 0.0
    %914 = vmatpush2.xpose.msra.mxu0 0.0
    %915 = vmatprep.subr.mxu0 0.0
    %916 = vmatpush2.xpose.msra.mxu0 0.0
    %917 = vmatprep.subr.mxu0 0.0
    %918 = vmatpush2.xpose.msra.mxu0 0.0
    %919 = vmatprep.subr.mxu0 0.0
    %920 = vmatpush2.xpose.msra.mxu0 0.0
    %921 = vmatprep.subr.mxu0 0.0
    %922 = vmatpush2.xpose.msra.mxu0 0.0
    %923 = vmatprep.subr.mxu0 0.0
    %924 = vmatpush2.xpose.msra.mxu0 0.0
    %925 = vmatprep.subr.mxu0 0.0
    %926 = vmatpush2.xpose.msra.mxu0 0.0
    %927 = vmatprep.subr.mxu0 0.0
    %928 = vmatpush2.xpose.msra.mxu0 0.0
    %929 = vmatprep.subr.mxu0 0.0
    %930 = vmatpush2.xpose.msra.mxu0 0.0
    %931 = vmatprep.subr.mxu0 0.0
    %932 = vmatpush2.xpose.msra.mxu0 0.0
    %933 = vmatprep.subr.mxu0 0.0
    %934 = vmatpush2.xpose.msra.mxu0 0.0
    %935 = vmatprep.subr.mxu0 0.0
    %936 = vmatpush2.xpose.msra.mxu0 0.0
    %937 = vmatprep.subr.mxu0 0.0
    %938 = vmatpush2.xpose.msra.mxu0 0.0
    %939 = vmatprep.subr.mxu0 0.0
    %940 = vmatpush2.xpose.msra.mxu0 0.0
    %941 = vmatprep.subr.mxu0 0.0
    %942 = vmatpush2.xpose.msra.mxu0 0.0
    %943 = vmatprep.subr.mxu0 0.0
    %944 = vmatpush2.xpose.msra.mxu0 0.0
    %945 = vmatprep.mubr.f32.mxu0 0.0
    %946 = vmatmul.mubr.f32.gmra.mxu0 %v877
    %v947 = vpop.f32.mrf.mxu0
    %v948 = vadd.f32 0.0, %v947
    %v949 = vpop.f32.mrf.mxu0
    %950 = vmatprep.mubr.f32.mxu0 0.0
    %951 = vmatmul.mubr.f32.gmra.mxu0 %v879
    %v952 = vpop.f32.mrf.mxu0
    %v953 = vadd.f32 0.0, %v952
    %v954 = vpop.f32.mrf.mxu0
    %955 = vdwg.mxu0
    %v956 = vmul.f32 %v663, %v663
    %v957 = vmul.f32 %v664, %v664
    %960 = vrot.lane.b32.xlu0 %v956, 126
    %v961 = vpop.permute.xlu0 %960
    %962 = vrot.lane.b32.xlu0 %v957, 126
    %v963 = vpop.permute.xlu0 %962
    %v966 = vsel %vm876, %v961, 0.0
    %967 = vadd.xlane.f32.xlu0 %v966
    %v968 = vpop.xlane.xlu0 %967
    %vm969 = vcmask 21504
    %v970 = vsel %vm969, %v963, 0.0
    %971 = vadd.xlane.f32.xlu0 %v970
    %v972 = vpop.xlane.xlu0 %971
    %v973 = vrsqrt.pop %v968
    %v974 = vmul.f32 %v968, %v973
    %vm975 = vcmp.eq.f32.partialorder %v968, inf
    %v976 = vsel %vm975, %v968, %v974
    %vm977 = vcmp.eq.f32.partialorder %v968, 0.0
    %v978 = vand.u32 %v968, 2147483648
    %v979 = vsel %vm977, %v978, %v976
    %v980 = vrsqrt.pop %v972
    %v981 = vmul.f32 %v972, %v980
    %vm982 = vcmp.eq.f32.partialorder %v972, inf
    %v983 = vsel %vm982, %v972, %v981
    %vm984 = vcmp.eq.f32.partialorder %v972, 0.0
    %v985 = vand.u32 %v972, 2147483648
    %v986 = vsel %vm984, %v985, %v983
    %v988 = vsel %vm782, %v979, 0
    %v991 = vsel %vm782, %v986, 0
    %993 = vmatprep.subr.mxu0 0.0
    %994 = vmatpush1.xpose.msra.mxu0 0.0
    %995 = vmatprep.subr.mxu0 0.0
    %996 = vmatpush1.xpose.msra.mxu0 0.0
    %997 = vmatprep.subr.mxu0 0.0
    %998 = vmatpush1.xpose.msra.mxu0 0.0
    %999 = vmatprep.subr.mxu0 0.0
    %1000 = vmatpush1.xpose.msra.mxu0 0.0
    %1001 = vmatprep.subr.mxu0 0.0
    %1002 = vmatpush1.xpose.msra.mxu0 0.0
    %1003 = vmatprep.subr.mxu0 0.0
    %1004 = vmatpush1.xpose.msra.mxu0 0.0
    %1005 = vmatprep.subr.mxu0 0.0
    %1006 = vmatpush1.xpose.msra.mxu0 0.0
    %1007 = vmatprep.subr.mxu0 0.0
    %1008 = vmatpush1.xpose.msra.mxu0 0.0
    %1009 = vmatprep.subr.mxu0 0.0
    %1010 = vmatpush1.xpose.msra.mxu0 0.0
    %1011 = vmatprep.subr.mxu0 0.0
    %1012 = vmatpush1.xpose.msra.mxu0 0.0
    %1013 = vmatprep.subr.mxu0 0.0
    %1014 = vmatpush1.xpose.msra.mxu0 0.0
    %1015 = vmatprep.subr.mxu0 0.0
    %1016 = vmatpush1.xpose.msra.mxu0 0.0
    %1017 = vmatprep.subr.mxu0 0.0
    %1018 = vmatpush1.xpose.msra.mxu0 0.0
    %1019 = vmatprep.subr.mxu0 0.0
    %1020 = vmatpush1.xpose.msra.mxu0 0.0
    %1021 = vmatprep.subr.mxu0 0.0
    %1022 = vmatpush1.xpose.msra.mxu0 %v991
    %1023 = vmatprep.subr.mxu0 0.0
    %1024 = vmatpush1.xpose.msra.mxu0 %v988
    %1025 = vmatprep.subr.mxu0 0.0
    %1026 = vmatpush2.xpose.msra.mxu0 0.0
    %1027 = vmatprep.subr.mxu0 0.0
    %1028 = vmatpush2.xpose.msra.mxu0 0.0
    %1029 = vmatprep.subr.mxu0 0.0
    %1030 = vmatpush2.xpose.msra.mxu0 0.0
    %1031 = vmatprep.subr.mxu0 0.0
    %1032 = vmatpush2.xpose.msra.mxu0 0.0
    %1033 = vmatprep.subr.mxu0 0.0
    %1034 = vmatpush2.xpose.msra.mxu0 0.0
    %1035 = vmatprep.subr.mxu0 0.0
    %1036 = vmatpush2.xpose.msra.mxu0 0.0
    %1037 = vmatprep.subr.mxu0 0.0
    %1038 = vmatpush2.xpose.msra.mxu0 0.0
    %1039 = vmatprep.subr.mxu0 0.0
    %1040 = vmatpush2.xpose.msra.mxu0 0.0
    %1041 = vmatprep.subr.mxu0 0.0
    %1042 = vmatpush2.xpose.msra.mxu0 0.0
    %1043 = vmatprep.subr.mxu0 0.0
    %1044 = vmatpush2.xpose.msra.mxu0 0.0
    %1045 = vmatprep.subr.mxu0 0.0
    %1046 = vmatpush2.xpose.msra.mxu0 0.0
    %1047 = vmatprep.subr.mxu0 0.0
    %1048 = vmatpush2.xpose.msra.mxu0 0.0
    %1049 = vmatprep.subr.mxu0 0.0
    %1050 = vmatpush2.xpose.msra.mxu0 0.0
    %1051 = vmatprep.subr.mxu0 0.0
    %1052 = vmatpush2.xpose.msra.mxu0 0.0
    %1053 = vmatprep.subr.mxu0 0.0
    %1054 = vmatpush2.xpose.msra.mxu0 0.0
    %1055 = vmatprep.subr.mxu0 0.0
    %1056 = vmatpush2.xpose.msra.mxu0 0.0
    %1057 = vmatprep.mubr.f32.mxu0 0.0
    %1058 = vmatmul.mubr.f32.gmra.mxu0 %v988
    %v1059 = vpop.f32.mrf.mxu0
    %v1060 = vadd.f32 0.0, %v1059
    %v1061 = vpop.f32.mrf.mxu0
    %1062 = vmatprep.mubr.f32.mxu0 0.0
    %1063 = vmatmul.mubr.f32.gmra.mxu0 %v991
    %v1064 = vpop.f32.mrf.mxu0
    %v1065 = vadd.f32 0.0, %v1064
    %v1066 = vpop.f32.mrf.mxu0
    %1067 = vdwg.mxu0
    %v1068 = vmax.f32 %v1060, 1e-08
    %v1069 = vmax.f32 %v1065, 1e-08
    %v1070 = vrcp.pop %v1068
    %v1071 = vrcp.pop %v1069
    %v1072 = vmul.f32 %v948, %v1070
    %v1073 = vmul.f32 %v953, %v1071
    %v1074 = vadd.f32 %v868, %v1072
    %v1075 = vadd.f32 %v869, %v1073
    %v1077 = vsel %vm782, %v652, 0
    %v1080 = vsel %vm782, %v653, 0
    %1082 = vmatprep.subr.mxu0 0.0
    %1083 = vmatpush1.xpose.msra.mxu0 0.0
    %1084 = vmatprep.subr.mxu0 0.0
    %1085 = vmatpush1.xpose.msra.mxu0 0.0
    %1086 = vmatprep.subr.mxu0 0.0
    %1087 = vmatpush1.xpose.msra.mxu0 0.0
    %1088 = vmatprep.subr.mxu0 0.0
    %1089 = vmatpush1.xpose.msra.mxu0 0.0
    %1090 = vmatprep.subr.mxu0 0.0
    %1091 = vmatpush1.xpose.msra.mxu0 0.0
    %1092 = vmatprep.subr.mxu0 0.0
    %1093 = vmatpush1.xpose.msra.mxu0 0.0
    %1094 = vmatprep.subr.mxu0 0.0
    %1095 = vmatpush1.xpose.msra.mxu0 0.0
    %1096 = vmatprep.subr.mxu0 0.0
    %1097 = vmatpush1.xpose.msra.mxu0 0.0
    %1098 = vmatprep.subr.mxu0 0.0
    %1099 = vmatpush1.xpose.msra.mxu0 0.0
    %1100 = vmatprep.subr.mxu0 0.0
    %1101 = vmatpush1.xpose.msra.mxu0 0.0
    %1102 = vmatprep.subr.mxu0 0.0
    %1103 = vmatpush1.xpose.msra.mxu0 0.0
    %1104 = vmatprep.subr.mxu0 0.0
    %1105 = vmatpush1.xpose.msra.mxu0 0.0
    %1106 = vmatprep.subr.mxu0 0.0
    %1107 = vmatpush1.xpose.msra.mxu0 0.0
    %1108 = vmatprep.subr.mxu0 0.0
    %1109 = vmatpush1.xpose.msra.mxu0 0.0
    %1110 = vmatprep.subr.mxu0 0.0
    %1111 = vmatpush1.xpose.msra.mxu0 %v1080
    %1112 = vmatprep.subr.mxu0 0.0
    %1113 = vmatpush1.xpose.msra.mxu0 %v1077
    %1114 = vmatprep.subr.mxu0 0.0
    %1115 = vmatpush2.xpose.msra.mxu0 0.0
    %1116 = vmatprep.subr.mxu0 0.0
    %1117 = vmatpush2.xpose.msra.mxu0 0.0
    %1118 = vmatprep.subr.mxu0 0.0
    %1119 = vmatpush2.xpose.msra.mxu0 0.0
    %1120 = vmatprep.subr.mxu0 0.0
    %1121 = vmatpush2.xpose.msra.mxu0 0.0
    %1122 = vmatprep.subr.mxu0 0.0
    %1123 = vmatpush2.xpose.msra.mxu0 0.0
    %1124 = vmatprep.subr.mxu0 0.0
    %1125 = vmatpush2.xpose.msra.mxu0 0.0
    %1126 = vmatprep.subr.mxu0 0.0
    %1127 = vmatpush2.xpose.msra.mxu0 0.0
    %1128 = vmatprep.subr.mxu0 0.0
    %1129 = vmatpush2.xpose.msra.mxu0 0.0
    %1130 = vmatprep.subr.mxu0 0.0
    %1131 = vmatpush2.xpose.msra.mxu0 0.0
    %1132 = vmatprep.subr.mxu0 0.0
    %1133 = vmatpush2.xpose.msra.mxu0 0.0
    %1134 = vmatprep.subr.mxu0 0.0
    %1135 = vmatpush2.xpose.msra.mxu0 0.0
    %1136 = vmatprep.subr.mxu0 0.0
    %1137 = vmatpush2.xpose.msra.mxu0 0.0
    %1138 = vmatprep.subr.mxu0 0.0
    %1139 = vmatpush2.xpose.msra.mxu0 0.0
    %1140 = vmatprep.subr.mxu0 0.0
    %1141 = vmatpush2.xpose.msra.mxu0 0.0
    %1142 = vmatprep.subr.mxu0 0.0
    %1143 = vmatpush2.xpose.msra.mxu0 0.0
    %1144 = vmatprep.subr.mxu0 0.0
    %1145 = vmatpush2.xpose.msra.mxu0 0.0
    %1146 = vmatprep.mubr.f32.mxu0 0.0
    %1147 = vmatmul.mubr.f32.gmra.mxu0 %v1077
    %v1148 = vpop.f32.mrf.mxu0
    %v1149 = vadd.f32 0.0, %v1148
    %v1150 = vpop.f32.mrf.mxu0
    %1151 = vmatprep.mubr.f32.mxu0 0.0
    %1152 = vmatmul.mubr.f32.gmra.mxu0 %v1080
    %v1153 = vpop.f32.mrf.mxu0
    %v1154 = vadd.f32 0.0, %v1153
    %v1155 = vpop.f32.mrf.mxu0
    %1156 = vdwg.mxu0
    %v1157 = vmul.f32 %v652, %v652
    %v1158 = vmul.f32 %v653, %v653
    %v1159 = vadd.f32 %v1157, 0.0
    %v1160 = vadd.f32 %v1158, 0.0
    %v1161 = vrsqrt.pop %v1159
    %v1162 = vmul.f32 %v1159, %v1161
    %vm1163 = vcmp.eq.f32.partialorder %v1159, inf
    %v1164 = vsel %vm1163, %v1159, %v1162
    %vm1165 = vcmp.eq.f32.partialorder %v1159, 0.0
    %v1166 = vand.u32 %v1159, 2147483648
    %v1167 = vsel %vm1165, %v1166, %v1164
    %v1168 = vrsqrt.pop %v1160
    %v1169 = vmul.f32 %v1160, %v1168
    %vm1170 = vcmp.eq.f32.partialorder %v1160, inf
    %v1171 = vsel %vm1170, %v1160, %v1169
    %vm1172 = vcmp.eq.f32.partialorder %v1160, 0.0
    %v1173 = vand.u32 %v1160, 2147483648
    %v1174 = vsel %vm1172, %v1173, %v1171
    %v1176 = vsel %vm782, %v1167, 0
    %v1179 = vsel %vm782, %v1174, 0
    %1181 = vmatprep.subr.mxu0 0.0
    %1182 = vmatpush1.xpose.msra.mxu0 0.0
    %1183 = vmatprep.subr.mxu0 0.0
    %1184 = vmatpush1.xpose.msra.mxu0 0.0
    %1185 = vmatprep.subr.mxu0 0.0
    %1186 = vmatpush1.xpose.msra.mxu0 0.0
    %1187 = vmatprep.subr.mxu0 0.0
    %1188 = vmatpush1.xpose.msra.mxu0 0.0
    %1189 = vmatprep.subr.mxu0 0.0
    %1190 = vmatpush1.xpose.msra.mxu0 0.0
    %1191 = vmatprep.subr.mxu0 0.0
    %1192 = vmatpush1.xpose.msra.mxu0 0.0
    %1193 = vmatprep.subr.mxu0 0.0
    %1194 = vmatpush1.xpose.msra.mxu0 0.0
    %1195 = vmatprep.subr.mxu0 0.0
    %1196 = vmatpush1.xpose.msra.mxu0 0.0
    %1197 = vmatprep.subr.mxu0 0.0
    %1198 = vmatpush1.xpose.msra.mxu0 0.0
    %1199 = vmatprep.subr.mxu0 0.0
    %1200 = vmatpush1.xpose.msra.mxu0 0.0
    %1201 = vmatprep.subr.mxu0 0.0
    %1202 = vmatpush1.xpose.msra.mxu0 0.0
    %1203 = vmatprep.subr.mxu0 0.0
    %1204 = vmatpush1.xpose.msra.mxu0 0.0
    %1205 = vmatprep.subr.mxu0 0.0
    %1206 = vmatpush1.xpose.msra.mxu0 0.0
    %1207 = vmatprep.subr.mxu0 0.0
    %1208 = vmatpush1.xpose.msra.mxu0 0.0
    %1209 = vmatprep.subr.mxu0 0.0
    %1210 = vmatpush1.xpose.msra.mxu0 %v1179
    %1211 = vmatprep.subr.mxu0 0.0
    %1212 = vmatpush1.xpose.msra.mxu0 %v1176
    %1213 = vmatprep.subr.mxu0 0.0
    %1214 = vmatpush2.xpose.msra.mxu0 0.0
    %1215 = vmatprep.subr.mxu0 0.0
    %1216 = vmatpush2.xpose.msra.mxu0 0.0
    %1217 = vmatprep.subr.mxu0 0.0
    %1218 = vmatpush2.xpose.msra.mxu0 0.0
    %1219 = vmatprep.subr.mxu0 0.0
    %1220 = vmatpush2.xpose.msra.mxu0 0.0
    %1221 = vmatprep.subr.mxu0 0.0
    %1222 = vmatpush2.xpose.msra.mxu0 0.0
    %1223 = vmatprep.subr.mxu0 0.0
    %1224 = vmatpush2.xpose.msra.mxu0 0.0
    %1225 = vmatprep.subr.mxu0 0.0
    %1226 = vmatpush2.xpose.msra.mxu0 0.0
    %1227 = vmatprep.subr.mxu0 0.0
    %1228 = vmatpush2.xpose.msra.mxu0 0.0
    %1229 = vmatprep.subr.mxu0 0.0
    %1230 = vmatpush2.xpose.msra.mxu0 0.0
    %1231 = vmatprep.subr.mxu0 0.0
    %1232 = vmatpush2.xpose.msra.mxu0 0.0
    %1233 = vmatprep.subr.mxu0 0.0
    %1234 = vmatpush2.xpose.msra.mxu0 0.0
    %1235 = vmatprep.subr.mxu0 0.0
    %1236 = vmatpush2.xpose.msra.mxu0 0.0
    %1237 = vmatprep.subr.mxu0 0.0
    %1238 = vmatpush2.xpose.msra.mxu0 0.0
    %1239 = vmatprep.subr.mxu0 0.0
    %1240 = vmatpush2.xpose.msra.mxu0 0.0
    %1241 = vmatprep.subr.mxu0 0.0
    %1242 = vmatpush2.xpose.msra.mxu0 0.0
    %1243 = vmatprep.subr.mxu0 0.0
    %1244 = vmatpush2.xpose.msra.mxu0 0.0
    %1245 = vmatprep.mubr.f32.mxu0 0.0
    %1246 = vmatmul.mubr.f32.gmra.mxu0 %v1176
    %v1247 = vpop.f32.mrf.mxu0
    %v1248 = vadd.f32 0.0, %v1247
    %v1249 = vpop.f32.mrf.mxu0
    %1250 = vmatprep.mubr.f32.mxu0 0.0
    %1251 = vmatmul.mubr.f32.gmra.mxu0 %v1179
    %v1252 = vpop.f32.mrf.mxu0
    %v1253 = vadd.f32 0.0, %v1252
    %v1254 = vpop.f32.mrf.mxu0
    %1255 = vdwg.mxu0
    %v1256 = vmax.f32 %v1248, 1e-08
    %v1257 = vmax.f32 %v1253, 1e-08
    %v1258 = vrcp.pop %v1256
    %v1259 = vrcp.pop %v1257
    %v1260 = vmul.f32 %v1149, %v1258
    %v1261 = vmul.f32 %v1154, %v1259
    %v1262 = vadd.f32 %v1074, %v1260
    %v1263 = vadd.f32 %v1075, %v1261
    %v1264 = vld [vmem:[%s4] sm:$0xff]
    %v1265 = vld [vmem:[%s4 + $0x10] sm:$0x3f]
    %1268 = vrot.lane.b32.xlu0 %v1264, 120
    %v1269 = vpop.permute.xlu0 %1268
    %1270 = vrot.lane.b32.xlu0 %v1265, 120
    %v1271 = vpop.permute.xlu0 %1270
    %vm1273 = vcmask 113664
    %v1275 = vsel %vm1273, %v1262, 0
    %v1278 = vsel %vm1273, %v1263, 0
    %vm1280 = vcmask 1045504
    %v1281 = vsel %vm1280, %v1271, 0
    %1283 = vmatprep.subr.mxu0 0.0
    %1284 = vmatpush1.msra.mxu0 0.0
    %1285 = vmatprep.subr.mxu0 0.0
    %1286 = vmatpush1.msra.mxu0 0.0
    %1287 = vmatprep.subr.mxu0 0.0
    %1288 = vmatpush1.msra.mxu0 0.0
    %1289 = vmatprep.subr.mxu0 0.0
    %1290 = vmatpush1.msra.mxu0 0.0
    %1291 = vmatprep.subr.mxu0 0.0
    %1292 = vmatpush1.msra.mxu0 0.0
    %1293 = vmatprep.subr.mxu0 0.0
    %1294 = vmatpush1.msra.mxu0 0.0
    %1295 = vmatprep.subr.mxu0 0.0
    %1296 = vmatpush1.msra.mxu0 0.0
    %1297 = vmatprep.subr.mxu0 0.0
    %1298 = vmatpush1.msra.mxu0 0.0
    %1299 = vmatprep.subr.mxu0 0.0
    %1300 = vmatpush1.msra.mxu0 0.0
    %1301 = vmatprep.subr.mxu0 0.0
    %1302 = vmatpush1.msra.mxu0 0.0
    %1303 = vmatprep.subr.mxu0 0.0
    %1304 = vmatpush1.msra.mxu0 0.0
    %1305 = vmatprep.subr.mxu0 0.0
    %1306 = vmatpush1.msra.mxu0 0.0
    %1307 = vmatprep.subr.mxu0 0.0
    %1308 = vmatpush1.msra.mxu0 0.0
    %1309 = vmatprep.subr.mxu0 0.0
    %1310 = vmatpush1.msra.mxu0 0.0
    %1311 = vmatprep.subr.mxu0 0.0
    %1312 = vmatpush1.msra.mxu0 %v1281
    %1313 = vmatprep.subr.mxu0 0.0
    %1314 = vmatpush1.msra.mxu0 %v1269
    %1315 = vmatprep.subr.mxu0 0.0
    %1316 = vmatpush2.msra.mxu0 0.0
    %1317 = vmatprep.subr.mxu0 0.0
    %1318 = vmatpush2.msra.mxu0 0.0
    %1319 = vmatprep.subr.mxu0 0.0
    %1320 = vmatpush2.msra.mxu0 0.0
    %1321 = vmatprep.subr.mxu0 0.0
    %1322 = vmatpush2.msra.mxu0 0.0
    %1323 = vmatprep.subr.mxu0 0.0
    %1324 = vmatpush2.msra.mxu0 0.0
    %1325 = vmatprep.subr.mxu0 0.0
    %1326 = vmatpush2.msra.mxu0 0.0
    %1327 = vmatprep.subr.mxu0 0.0
    %1328 = vmatpush2.msra.mxu0 0.0
    %1329 = vmatprep.subr.mxu0 0.0
    %1330 = vmatpush2.msra.mxu0 0.0
    %1331 = vmatprep.subr.mxu0 0.0
    %1332 = vmatpush2.msra.mxu0 0.0
    %1333 = vmatprep.subr.mxu0 0.0
    %1334 = vmatpush2.msra.mxu0 0.0
    %1335 = vmatprep.subr.mxu0 0.0
    %1336 = vmatpush2.msra.mxu0 0.0
    %1337 = vmatprep.subr.mxu0 0.0
    %1338 = vmatpush2.msra.mxu0 0.0
    %1339 = vmatprep.subr.mxu0 0.0
    %1340 = vmatpush2.msra.mxu0 0.0
    %1341 = vmatprep.subr.mxu0 0.0
    %1342 = vmatpush2.msra.mxu0 0.0
    %1343 = vmatprep.subr.mxu0 0.0
    %1344 = vmatpush2.msra.mxu0 0.0
    %1345 = vmatprep.subr.mxu0 0.0
    %1346 = vmatpush2.msra.mxu0 0.0
    %1347 = vmatprep.mubr.f32.mxu0 0.0
    %1348 = vmatmul.mubr.f32.gmra.mxu0 %v1275
    %v1349 = vpop.f32.mrf.mxu0
    %v1350 = vadd.f32 0.0, %v1349
    %v1351 = vpop.f32.mrf.mxu0
    %1352 = vmatprep.mubr.f32.mxu0 0.0
    %1353 = vmatmul.mubr.f32.gmra.mxu0 %v1278
    %v1354 = vpop.f32.mrf.mxu0
    %v1355 = vpop.f32.mrf.mxu0
    %1356 = vdwg.mxu0
    %v1357 = vld [vmem:[%s4] sm:$0x7]
    %v1358 = vld [vmem:[%s4] ss:$0 sm:$0xff]
    %1360 = vrot.lane.b32.xlu0 %v1357, 117
    %v1361 = vpop.permute.xlu0 %1360
    %1363 = vrot.lane.b32.xlu0 %v1358, 113
    %v1364 = vpop.permute.xlu0 %1363
    %v1367 = vsel %vm876, %v1350, 0
    %vm1369 = vcmask 1042432
    %v1370 = vsel %vm1369, %v1361, 0
    %1372 = vmatprep.subr.mxu0 0.0
    %1373 = vmatpush1.msra.mxu0 0.0
    %1374 = vmatprep.subr.mxu0 0.0
    %1375 = vmatpush1.msra.mxu0 0.0
    %1376 = vmatprep.subr.mxu0 0.0
    %1377 = vmatpush1.msra.mxu0 0.0
    %1378 = vmatprep.subr.mxu0 0.0
    %1379 = vmatpush1.msra.mxu0 0.0
    %1380 = vmatprep.subr.mxu0 0.0
    %1381 = vmatpush1.msra.mxu0 0.0
    %1382 = vmatprep.subr.mxu0 0.0
    %1383 = vmatpush1.msra.mxu0 0.0
    %1384 = vmatprep.subr.mxu0 0.0
    %1385 = vmatpush1.msra.mxu0 0.0
    %1386 = vmatprep.subr.mxu0 0.0
    %1387 = vmatpush1.msra.mxu0 0.0
    %1388 = vmatprep.subr.mxu0 0.0
    %1389 = vmatpush1.msra.mxu0 0.0
    %1390 = vmatprep.subr.mxu0 0.0
    %1391 = vmatpush1.msra.mxu0 0.0
    %1392 = vmatprep.subr.mxu0 0.0
    %1393 = vmatpush1.msra.mxu0 0.0
    %1394 = vmatprep.subr.mxu0 0.0
    %1395 = vmatpush1.msra.mxu0 0.0
    %1396 = vmatprep.subr.mxu0 0.0
    %1397 = vmatpush1.msra.mxu0 0.0
    %1398 = vmatprep.subr.mxu0 0.0
    %1399 = vmatpush1.msra.mxu0 0.0
    %1400 = vmatprep.subr.mxu0 0.0
    %1401 = vmatpush1.msra.mxu0 0.0
    %1402 = vmatprep.subr.mxu0 0.0
    %1403 = vmatpush1.msra.mxu0 %v1370
    %1404 = vmatprep.subr.mxu0 0.0
    %1405 = vmatpush2.msra.mxu0 0.0
    %1406 = vmatprep.subr.mxu0 0.0
    %1407 = vmatpush2.msra.mxu0 0.0
    %1408 = vmatprep.subr.mxu0 0.0
    %1409 = vmatpush2.msra.mxu0 0.0
    %1410 = vmatprep.subr.mxu0 0.0
    %1411 = vmatpush2.msra.mxu0 0.0
    %1412 = vmatprep.subr.mxu0 0.0
    %1413 = vmatpush2.msra.mxu0 0.0
    %1414 = vmatprep.subr.mxu0 0.0
    %1415 = vmatpush2.msra.mxu0 0.0
    %1416 = vmatprep.subr.mxu0 0.0
    %1417 = vmatpush2.msra.mxu0 0.0
    %1418 = vmatprep.subr.mxu0 0.0
    %1419 = vmatpush2.msra.mxu0 0.0
    %1420 = vmatprep.subr.mxu0 0.0
    %1421 = vmatpush2.msra.mxu0 0.0
    %1422 = vmatprep.subr.mxu0 0.0
    %1423 = vmatpush2.msra.mxu0 0.0
    %1424 = vmatprep.subr.mxu0 0.0
    %1425 = vmatpush2.msra.mxu0 0.0
    %1426 = vmatprep.subr.mxu0 0.0
    %1427 = vmatpush2.msra.mxu0 0.0
    %1428 = vmatprep.subr.mxu0 0.0
    %1429 = vmatpush2.msra.mxu0 0.0
    %1430 = vmatprep.subr.mxu0 0.0
    %1431 = vmatpush2.msra.mxu0 0.0
    %1432 = vmatprep.subr.mxu0 0.0
    %1433 = vmatpush2.msra.mxu0 0.0
    %1434 = vmatprep.subr.mxu0 0.0
    %1435 = vmatpush2.msra.mxu0 0.0
    %1436 = vmatprep.mubr.f32.mxu0 0.0
    %1437 = vmatmul.mubr.f32.gmra.mxu0 %v1367
    %v1438 = vpop.f32.mrf.mxu0
    %v1439 = vadd.f32 %v1364, %v1438
    %v1440 = vpop.f32.mrf.mxu0
    %1441 = vdwg.mxu0
    %vm1442 = vcmask 25600
    %v1443 = vsel %vm1442, %v1439, -inf
    %1444 = vmax.xlane.f32.xlu0 %v1443
    %v1445 = vpop.xlane.xlu0 %1444
    %v1446 = vsub.f32 %v1439, %v1445
    %v1447 = vmul.f32 %v1446, 1.442695
    %v1448 = vpow.pop %v1447
    %v1449 = vsel %vm1442, %v1448, 0.0
    %1450 = vadd.xlane.f32.xlu0 %v1449
    %v1451 = vpop.xlane.xlu0 %1450
    %v1452 = vrcp.pop %v1451
    %v1453 = vmul.f32 %v1448, %v1452
    %v1454 = vsel %vm1442, %v1453, -inf
    %1455 = vmax.xlane.f32.xlu0 %v1454
    %v1456 = vpop.xlane.xlu0 %1455
    %v1457 = vsub.f32 %v1453, %v1456
    %v1458 = vmul.f32 %v1457, 1.442695
    %v1459 = vpow.pop %v1458
    %v1460 = vsel %vm1442, %v1459, 0.0
    %1461 = vadd.xlane.f32.xlu0 %v1460
    %v1462 = vpop.xlane.xlu0 %1461
    %v1463 = vlog2.pop %v1462
    %v1464 = vmul.f32 %v1463, 0.6931472
    %v1465 = vadd.f32 %v1456, %v1464
    %v1466 = vld [vmem:[%s1] sm:$0x3]
    %v1467 = vmul.f32 %v1453, %v1466
    %v1468 = vsel %vm1442, %v1467, 0.0
    %1469 = vadd.xlane.f32.xlu0 %v1468
    %v1470 = vpop.xlane.xlu0 %1469
    %v1471 = vsub.f32 %v1465, %v1470
    %vm1472 = vcmask 1041408
    %v1473 = vsel %vm1472, %v1471, 0.0
    %v1474 = vrot.slane %v1473, 4
    %v1475 = vadd.f32 %v1473, %v1474
    %v1476 = vrot.slane %v1475, 2
    %v1477 = vadd.f32 %v1475, %v1476
    %v1478 = vrot.slane %v1477, 1
    %v1479 = vadd.f32 %v1477, %v1478
    %v1480 = vmul.f32 %v1479, 0.5
    %v1481 = vadd.f32 %v1480, 0.0
    %1482 = vrot.lane.b32.xlu0 %v1350, 4
    %v1483 = vpop.permute.xlu0 %1482
    %vm1485 = vcmask 31744
    %v1486 = vsel %vm1485, %v1453, %v1483
    %vm1487 = vcmask 56320
    %v1488 = vsel %vm1487, %v1486, %v1481
    %vm1489 = vcmask 64512
    %v1490 = vsel %vm1489, %v1488, 0.0
    %v1491 = vsel %vm1472, %v1490, 0.0
    %1492 = vst [vmem:[%s6] sm:$0xff] %v1491
    // Predicated region
    $region30: #{depression_question_forward.1} parent=1 // pred_check
      _
    $region31: #{depression_question_forward.1} parent=1 // pred_check_branch
      %1494 = sbr.rel (0) target = $region33
    $region32: #{depression_question_forward.1} parent=1 // pred_region
      _
    $region33: #{depression_question_forward.1} parent=1 // pred_fallthru
      _
    // Predicated region
    $region34: #{depression_question_forward.1} parent=1 // pred_check
      _
    $region35: #{depression_question_forward.1} parent=1 // pred_check_branch
      %1496 = sbr.rel (0) target = $region37
    $region36: #{depression_question_forward.1} parent=1 // pred_region
      _
    $region37: #{depression_question_forward.1} parent=1 // pred_fallthru
      _
    %1497 = vsyncpa [#allocation3], 1

</llo_original>
